<compile_context>
chip_gen: v6e
topology: v6e:2x2x1
jax: 0.10.0
libtpu: 0.0.40
codegen_flags: <defaults>
</compile_context>

<pallas_src>
import math

import jax
import jax.numpy as jnp
from jax import lax
from jax.experimental import pallas as pl
from jax.experimental.pallas import tpu as pltpu  # noqa: F401  (kept for TPU-specific tuning hooks)

# ---------------- config (small, consistent with the module) ----------------
N = 2               # batch
L = 8               # sequence length
D = 32              # hidden_size
NUM_HEADS = 4       # num_attention_heads
HEAD_DIM = D // NUM_HEADS
INTER = 64          # intermediate_size
NUM_LAYERS = 2      # num_hidden_layers
LN_EPS = 1e-12      # layer_norm_eps

NL = N * L          # rows of the flattened activation slab
HNL = NUM_HEADS * NL
NVEC = 8            # packed small-vector rows per layer
VPAD = 128          # lane padding of the packed small vectors


def _gelu(x):
    # x * 0.5 * (1 + erf(x / sqrt(2)))  -- exact BERT gelu
    return x * 0.5 * (1.0 + lax.erf(x / math.sqrt(2.0)))


def _layernorm(x, gamma, beta):
    u = jnp.mean(x, axis=-1, keepdims=True)
    d = x - u
    s = jnp.mean(d * d, axis=-1, keepdims=True)
    return gamma * (d * lax.rsqrt(s + LN_EPS)) + beta


# ----------------------------- Pallas kernel --------------------------------
def _make_encoder_kernel(num_layers, write_all):
    """Builds a grid-less kernel with the layer loop statically unrolled."""

    def kernel(x_ref, addmask_ref, bd_ref, rep_ref, fold_ref,
               wqkv_ref, wo_ref, wi_ref, w2_ref, vec_ref, out_ref):
        # Layer-invariant constants: loaded once, stay resident.
        bd = bd_ref[...]            # (HNL, D)  block-diagonal head mask
        addmask = addmask_ref[...]  # (HNL, NL) key-padding + cross-batch mask
        rep = rep_ref[...]          # (HNL, NL) replicate-rows-over-heads matrix
        fold = fold_ref[...]        # (NL, HNL) head-fold matrix

        h = x_ref[...]              # (NL, D) hidden state, resident across layers

        for layer in range(num_layers):     # static unroll
            vecs = vec_ref[layer]           # (NVEC, VPAD) packed small vectors
            b_qkv = vecs[0:1, 0:3 * D]
            b_o   = vecs[1:2, 0:D]
            ln1_g = vecs[2:3, 0:D]
            ln1_b = vecs[3:4, 0:D]
            b_i   = vecs[4:5, 0:INTER]
            b_2   = vecs[5:6, 0:D]
            ln2_g = vecs[6:7, 0:D]
            ln2_b = vecs[7:8, 0:D]

            # ---- fused QKV projection (1/sqrt(head_dim) pre-folded into Q) ----
            qkv = jnp.dot(h, wqkv_ref[layer],
                          preferred_element_type=jnp.float32) + b_qkv
            q = qkv[:, 0:D]
            k = qkv[:, D:2 * D]
            v = qkv[:, 2 * D:3 * D]

            # ---- multi-head attention: all heads + all batch rows, 2 matmuls ----
            # Rows ordered (head, batch, query); rep broadcasts q over heads on
            # the MXU, bd restricts each row to its head's feature block.
            q_bd = jnp.dot(rep, q, preferred_element_type=jnp.float32) * bd   # (HNL, D)
            scores = lax.dot_general(q_bd, k, (((1,), (1,)), ((), ())),
                                     preferred_element_type=jnp.float32)      # (HNL, NL)
            scores = scores + addmask

            # Softmax over keys (full last axis -> plain lane reduction).
            m = jnp.max(scores, axis=-1, keepdims=True)
            e = jnp.exp(scores - m)
            den = jnp.sum(e, axis=-1, keepdims=True)
            p = e * pl.reciprocal(den, approx=True)                           # (HNL, NL)

            # Context for all heads, then fold head blocks back onto (NL, D)
            # with a single matmul (MXU) instead of sublane slices + adds.
            ctx_h = jnp.dot(p, v, preferred_element_type=jnp.float32) * bd    # (HNL, D)
            ctx = jnp.dot(fold, ctx_h, preferred_element_type=jnp.float32)    # (NL, D)

            # ---- BertSelfOutput: dense + residual + LayerNorm ----
            attn = jnp.dot(ctx, wo_ref[layer],
                           preferred_element_type=jnp.float32) + b_o
            h1 = _layernorm(attn + h, ln1_g, ln1_b)

            # ---- BertIntermediate: dense + gelu ----
            inter = _gelu(jnp.dot(h1, wi_ref[layer],
                                  preferred_element_type=jnp.float32) + b_i)

            # ---- BertOutput: dense + residual + LayerNorm ----
            out = jnp.dot(inter, w2_ref[layer],
                          preferred_element_type=jnp.float32) + b_2
            h = _layernorm(out + h1, ln2_g, ln2_b)

            if write_all:
                out_ref[layer] = h

        if not write_all:
            out_ref[0] = h

    return kernel


def _build_attention_constants(mask):
    """Host-side precompute of all layer-invariant attention constants."""
    n, l = mask.shape
    nl = n * l
    hnl = NUM_HEADS * nl
    # Block-diagonal head mask: bd[r, d] = 1 iff head(row r) == head(col d).
    row_head = (jnp.arange(hnl) // nl)[:, None]
    col_head = (jnp.arange(D) // HEAD_DIM)[None, :]
    bd = (row_head == col_head).astype(jnp.float32)                       # (HNL, D)
    # rep[h*NL + r, r] = 1  (replicate q rows over heads);  fold = rep.T.
    rep = ((jnp.arange(hnl) % nl)[:, None] == jnp.arange(nl)[None, :]
           ).astype(jnp.float32)                                          # (HNL, NL)
    fold = rep.T                                                          # (NL, HNL)
    # Additive masks: key padding (from attention_mask) + cross-batch block.
    neg = ((1.0 - mask) * -10000.0).reshape(1, nl)                        # (1, NL)
    row_b = ((jnp.arange(hnl) % nl) // l)[:, None]
    col_b = (jnp.arange(nl) // l)[None, :]
    cross = jnp.where(row_b == col_b, 0.0, -10000.0)                      # (HNL, NL)
    addmask = neg + cross
    return bd, rep, fold, addmask


def bert_encoder_pallas(x, mask, packed, output_all_encoded_layers=True):
    """x: (N, L, D), mask: (N, L).  Returns list of per-layer (N, L, D)."""
    n, l, d = x.shape
    wqkv, wo, wi, w2, vecs = packed
    num_layers = wqkv.shape[0]
    x_flat = x.reshape(n * l, d)

    bd, rep, fold, addmask = _build_attention_constants(mask)

    n_out = num_layers if output_all_encoded_layers else 1
    kernel = _make_encoder_kernel(num_layers, output_all_encoded_layers)

    # Grid-less pallas_call: every input is a whole-array VMEM block (total
    # footprint ~100 KiB, far below every generation's scoped VMEM default).
    out = pl.pallas_call(
        kernel,
        out_shape=jax.ShapeDtypeStruct((n_out, n * l, d), jnp.float32),
    )(x_flat, addmask, bd, rep, fold, wqkv, wo, wi, w2, vecs)

    return [out[i].reshape(n, l, d) for i in range(n_out)]


# --------------------------- parameter init / pack ---------------------------
def init_layer_params(key):
    ks = jax.random.split(key, 8)
    s = 0.02
    # Linear weights stored as (in, out) so the kernel does x @ W + b
    wq = s * jax.random.normal(ks[0], (D, D), jnp.float32)
    wk = s * jax.random.normal(ks[1], (D, D), jnp.float32)
    wv = s * jax.random.normal(ks[2], (D, D), jnp.float32)
    wo = s * jax.random.normal(ks[3], (D, D), jnp.float32)
    wi = s * jax.random.normal(ks[4], (D, INTER), jnp.float32)
    w2 = s * jax.random.normal(ks[5], (INTER, D), jnp.float32)
    bq = s * jax.random.normal(ks[6], (1, D), jnp.float32)
    bk = jnp.zeros((1, D), jnp.float32)
    bv = s * jax.random.normal(ks[7], (1, D), jnp.float32)
    bo = jnp.zeros((1, D), jnp.float32)
    bi = jnp.zeros((1, INTER), jnp.float32)
    b2 = jnp.zeros((1, D), jnp.float32)
    ln1g = jnp.ones((1, D), jnp.float32)
    ln1b = jnp.zeros((1, D), jnp.float32)
    ln2g = jnp.ones((1, D), jnp.float32)
    ln2b = jnp.zeros((1, D), jnp.float32)
    return (wq, bq, wk, bk, wv, bv, wo, bo, ln1g, ln1b, wi, bi, w2, b2, ln2g, ln2b)


def pack_params(all_params):
    """Stack per-layer params for the fused kernel.

    Static rewrites: Q weights/bias pre-scaled by 1/sqrt(head_dim); Q|K|V
    fused into one matrix; all 1-row vectors packed into one lane-dense
    (NVEC, VPAD) block per layer.
    """
    inv = 1.0 / math.sqrt(HEAD_DIM)
    wqkv_l, wo_l, wi_l, w2_l, vec_l = [], [], [], [], []
    for p in all_params:
        (wq, bq, wk, bk, wv, bv, wo, bo, ln1g, ln1b, wi, bi, w2, b2,
         ln2g, ln2b) = p
        wqkv_l.append(jnp.concatenate([wq * inv, wk, wv], axis=1))   # (D, 3D)
        bqkv = jnp.concatenate([bq * inv, bk, bv], axis=1)           # (1, 3D)
        wo_l.append(wo)
        wi_l.append(wi)
        w2_l.append(w2)
        vp = jnp.zeros((NVEC, VPAD), jnp.float32)
        vp = vp.at[0, :3 * D].set(bqkv[0])
        vp = vp.at[1, :D].set(bo[0])
        vp = vp.at[2, :D].set(ln1g[0])
        vp = vp.at[3, :D].set(ln1b[0])
        vp = vp.at[4, :INTER].set(bi[0])
        vp = vp.at[5, :D].set(b2[0])
        vp = vp.at[6, :D].set(ln2g[0])
        vp = vp.at[7, :D].set(ln2b[0])
        vec_l.append(vp)
    return (jnp.stack(wqkv_l), jnp.stack(wo_l), jnp.stack(wi_l),
            jnp.stack(w2_l), jnp.stack(vec_l))


# ------------------------- pure-JAX reference -------------------------------
def ref_layer(x, mask, p):
    (wq, bq, wk, bk, wv, bv, wo, bo, ln1g, ln1b, wi, bi, w2, b2, ln2g, ln2b) = p
    n, l, d = x.shape
    neg = (1.0 - mask[:, None, None, :]) * -10000.0      # (N,1,1,L)
    q = (x @ wq + bq).reshape(n, l, NUM_HEADS, HEAD_DIM).transpose(0, 2, 1, 3)
    k = (x @ wk + bk).reshape(n, l, NUM_HEADS, HEAD_DIM).transpose(0, 2, 1, 3)
    v = (x @ wv + bv).reshape(n, l, NUM_HEADS, HEAD_DIM).transpose(0, 2, 1, 3)
    scores = jnp.einsum("nhqd,nhkd->nhqk", q, k) / math.sqrt(HEAD_DIM) + neg
    probs = jax.nn.softmax(scores, axis=-1)
    ctx = jnp.einsum("nhqk,nhkd->nhqd", probs, v).transpose(0, 2, 1, 3).reshape(n, l, d)
    attn = ctx @ wo + bo
    h1 = _layernorm(attn + x, ln1g, ln1b)
    inter = _gelu(h1 @ wi + bi)
    out = inter @ w2 + b2
    return _layernorm(out + h1, ln2g, ln2b)


def ref_encoder(x, mask, all_params):
    outs = []
    h = x
    for p in all_params:
        h = ref_layer(h, mask, p)
        outs.append(h)
    return outs


# ------------------------------- main ----------------------------------------
if __name__ == "__main__":
    key = jax.random.PRNGKey(0)
    kx, kp = jax.random.split(key)

    x = jax.random.normal(kx, (N, L, D), jnp.float32)
    # attention_mask (N, L): last two positions of batch element 1 are padding
    mask = jnp.ones((N, L), jnp.float32)
    mask = mask.at[1, -2:].set(0.0)

    all_params = [init_layer_params(jax.random.fold_in(kp, i))
                  for i in range(NUM_LAYERS)]
    packed = pack_params(all_params)

    refs = ref_encoder(x, mask, all_params)

    # output_all_encoded_layers=True path
    outs = bert_encoder_pallas(x, mask, packed, output_all_encoded_layers=True)
    outs = [jax.block_until_ready(o) for o in outs]
    assert len(outs) == NUM_LAYERS
    for o, r in zip(outs, refs):
        assert o.shape == (N, L, D)
        assert jnp.allclose(o, r, atol=1e-4, rtol=1e-4), float(jnp.max(jnp.abs(o - r)))

    # output_all_encoded_layers=False path (single writeback of the final layer)
    last = bert_encoder_pallas(x, mask, packed, output_all_encoded_layers=False)
    last = [jax.block_until_ready(o) for o in last]
    assert len(last) == 1
    assert jnp.allclose(last[0], refs[-1], atol=1e-4, rtol=1e-4), \
        float(jnp.max(jnp.abs(last[0] - refs[-1])))

    print("KERNEL_OK")
</pallas_src>

<mosaic_0001>
module attributes {stable_mosaic.version = 11 : i64} {
  func.func @kernel(%arg0: memref<16x32xf32, #tpu.memory_space<vmem>>, %arg1: memref<64x16xf32, #tpu.memory_space<vmem>>, %arg2: memref<64x32xf32, #tpu.memory_space<vmem>>, %arg3: memref<64x16xf32, #tpu.memory_space<vmem>>, %arg4: memref<16x64xf32, #tpu.memory_space<vmem>>, %arg5: memref<2x32x96xf32, #tpu.memory_space<vmem>>, %arg6: memref<2x32x32xf32, #tpu.memory_space<vmem>>, %arg7: memref<2x32x64xf32, #tpu.memory_space<vmem>>, %arg8: memref<2x64x32xf32, #tpu.memory_space<vmem>>, %arg9: memref<2x8x128xf32, #tpu.memory_space<vmem>>, %arg10: memref<2x16x32xf32, #tpu.memory_space<vmem>>) attributes {dimension_semantics = [], scalar_prefetch = 0 : i64, scratch_operands = 0 : i64, tpu.core_type = #tpu.core_type<tc>} {
    %c0 = arith.constant 0 : index
    %c0_0 = arith.constant 0 : index
    %0 = vector.load %arg2[%c0, %c0_0] : memref<64x32xf32, #tpu.memory_space<vmem>>, vector<64x32xf32>
    %c0_1 = arith.constant 0 : index
    %c0_2 = arith.constant 0 : index
    %1 = vector.load %arg1[%c0_1, %c0_2] : memref<64x16xf32, #tpu.memory_space<vmem>>, vector<64x16xf32>
    %c0_3 = arith.constant 0 : index
    %c0_4 = arith.constant 0 : index
    %2 = vector.load %arg3[%c0_3, %c0_4] : memref<64x16xf32, #tpu.memory_space<vmem>>, vector<64x16xf32>
    %c0_5 = arith.constant 0 : index
    %c0_6 = arith.constant 0 : index
    %3 = vector.load %arg4[%c0_5, %c0_6] : memref<16x64xf32, #tpu.memory_space<vmem>>, vector<16x64xf32>
    %c0_7 = arith.constant 0 : index
    %c0_8 = arith.constant 0 : index
    %4 = vector.load %arg0[%c0_7, %c0_8] : memref<16x32xf32, #tpu.memory_space<vmem>>, vector<16x32xf32>
    %c0_9 = arith.constant 0 : index
    %c0_10 = arith.constant 0 : index
    %c0_11 = arith.constant 0 : index
    %5 = vector.load %arg9[%c0_9, %c0_10, %c0_11] : memref<2x8x128xf32, #tpu.memory_space<vmem>>, vector<1x8x128xf32>
    %6 = vector.shape_cast %5 : vector<1x8x128xf32> to vector<8x128xf32>
    %7 = vector.extract_strided_slice %6 {offsets = [0, 0], sizes = [1, 96], strides = [1, 1]} : vector<8x128xf32> to vector<1x96xf32>
    %8 = vector.extract_strided_slice %6 {offsets = [1, 0], sizes = [1, 32], strides = [1, 1]} : vector<8x128xf32> to vector<1x32xf32>
    %9 = vector.extract_strided_slice %6 {offsets = [2, 0], sizes = [1, 32], strides = [1, 1]} : vector<8x128xf32> to vector<1x32xf32>
    %10 = vector.extract_strided_slice %6 {offsets = [3, 0], sizes = [1, 32], strides = [1, 1]} : vector<8x128xf32> to vector<1x32xf32>
    %11 = vector.extract_strided_slice %6 {offsets = [4, 0], sizes = [1, 64], strides = [1, 1]} : vector<8x128xf32> to vector<1x64xf32>
    %12 = vector.extract_strided_slice %6 {offsets = [5, 0], sizes = [1, 32], strides = [1, 1]} : vector<8x128xf32> to vector<1x32xf32>
    %13 = vector.extract_strided_slice %6 {offsets = [6, 0], sizes = [1, 32], strides = [1, 1]} : vector<8x128xf32> to vector<1x32xf32>
    %14 = vector.extract_strided_slice %6 {offsets = [7, 0], sizes = [1, 32], strides = [1, 1]} : vector<8x128xf32> to vector<1x32xf32>
    %c0_12 = arith.constant 0 : index
    %c0_13 = arith.constant 0 : index
    %c0_14 = arith.constant 0 : index
    %15 = vector.load %arg5[%c0_12, %c0_13, %c0_14] : memref<2x32x96xf32, #tpu.memory_space<vmem>>, vector<1x32x96xf32>
    %16 = vector.shape_cast %15 : vector<1x32x96xf32> to vector<32x96xf32>
    %cst = arith.constant dense<0.000000e+00> : vector<16x96xf32>
    %17 = tpu.matmul %4, %16, %cst {dimension_numbers = #tpu.dot_dimension_numbers<[1], [0], [0], [1], [0, 0, 1, 1], [], []>} : vector<16x32xf32>, vector<32x96xf32>, vector<16x96xf32> -> vector<16x96xf32>
    %18 = vector.broadcast %7 : vector<1x96xf32> to vector<16x96xf32>
    %19 = arith.addf %17, %18 : vector<16x96xf32>
    %20 = vector.extract_strided_slice %19 {offsets = [0, 0], sizes = [16, 32], strides = [1, 1]} : vector<16x96xf32> to vector<16x32xf32>
    %21 = vector.extract_strided_slice %19 {offsets = [0, 32], sizes = [16, 32], strides = [1, 1]} : vector<16x96xf32> to vector<16x32xf32>
    %22 = vector.extract_strided_slice %19 {offsets = [0, 64], sizes = [16, 32], strides = [1, 1]} : vector<16x96xf32> to vector<16x32xf32>
    %cst_15 = arith.constant dense<0.000000e+00> : vector<64x32xf32>
    %23 = tpu.matmul %2, %20, %cst_15 {dimension_numbers = #tpu.dot_dimension_numbers<[1], [0], [0], [1], [0, 0, 1, 1], [], []>} : vector<64x16xf32>, vector<16x32xf32>, vector<64x32xf32> -> vector<64x32xf32>
    %24 = arith.mulf %23, %0 : vector<64x32xf32>
    %cst_16 = arith.constant dense<0.000000e+00> : vector<64x16xf32>
    %25 = tpu.matmul %24, %21, %cst_16 {dimension_numbers = #tpu.dot_dimension_numbers<[1], [1], [0], [0], [0, 0, 1, 0], [], []>} : vector<64x32xf32>, vector<16x32xf32>, vector<64x16xf32> -> vector<64x16xf32>
    %26 = arith.addf %25, %1 : vector<64x16xf32>
    %cst_17 = arith.constant dense<0xFF800000> : vector<64xf32>
    %27 = vector.multi_reduction <maximumf>, %26, %cst_17 [1] : vector<64x16xf32> to vector<64xf32>
    %28 = vector.shape_cast %27 : vector<64xf32> to vector<64x1xf32>
    %29 = vector.broadcast %28 : vector<64x1xf32> to vector<64x16xf32>
    %30 = arith.subf %26, %29 : vector<64x16xf32>
    %31 = math.exp %30 : vector<64x16xf32>
    %cst_18 = arith.constant dense<0.000000e+00> : vector<64xf32>
    %32 = vector.multi_reduction <add>, %31, %cst_18 [1] : vector<64x16xf32> to vector<64xf32>
    %33 = vector.shape_cast %32 : vector<64xf32> to vector<64x1xf32>
    %34 = tpu.reciprocal %33 {approx = true} : vector<64x1xf32> -> vector<64x1xf32>
    %35 = vector.broadcast %34 : vector<64x1xf32> to vector<64x16xf32>
    %36 = arith.mulf %31, %35 : vector<64x16xf32>
    %cst_19 = arith.constant dense<0.000000e+00> : vector<64x32xf32>
    %37 = tpu.matmul %36, %22, %cst_19 {dimension_numbers = #tpu.dot_dimension_numbers<[1], [0], [0], [1], [0, 0, 1, 1], [], []>} : vector<64x16xf32>, vector<16x32xf32>, vector<64x32xf32> -> vector<64x32xf32>
    %38 = arith.mulf %37, %0 : vector<64x32xf32>
    %cst_20 = arith.constant dense<0.000000e+00> : vector<16x32xf32>
    %39 = tpu.matmul %3, %38, %cst_20 {dimension_numbers = #tpu.dot_dimension_numbers<[1], [0], [0], [1], [0, 0, 1, 1], [], []>} : vector<16x64xf32>, vector<64x32xf32>, vector<16x32xf32> -> vector<16x32xf32>
    %c0_21 = arith.constant 0 : index
    %c0_22 = arith.constant 0 : index
    %c0_23 = arith.constant 0 : index
    %40 = vector.load %arg6[%c0_21, %c0_22, %c0_23] : memref<2x32x32xf32, #tpu.memory_space<vmem>>, vector<1x32x32xf32>
    %41 = vector.shape_cast %40 : vector<1x32x32xf32> to vector<32x32xf32>
    %cst_24 = arith.constant dense<0.000000e+00> : vector<16x32xf32>
    %42 = tpu.matmul %39, %41, %cst_24 {dimension_numbers = #tpu.dot_dimension_numbers<[1], [0], [0], [1], [0, 0, 1, 1], [], []>} : vector<16x32xf32>, vector<32x32xf32>, vector<16x32xf32> -> vector<16x32xf32>
    %43 = vector.broadcast %8 : vector<1x32xf32> to vector<16x32xf32>
    %44 = arith.addf %42, %43 : vector<16x32xf32>
    %45 = arith.addf %44, %4 : vector<16x32xf32>
    %cst_25 = arith.constant dense<0.000000e+00> : vector<16xf32>
    %46 = vector.multi_reduction <add>, %45, %cst_25 [1] : vector<16x32xf32> to vector<16xf32>
    %47 = vector.shape_cast %46 : vector<16xf32> to vector<16x1xf32>
    %cst_26 = arith.constant 3.200000e+01 : f32
    %48 = vector.broadcast %cst_26 : f32 to vector<16x1xf32>
    %49 = arith.divf %47, %48 : vector<16x1xf32>
    %50 = vector.broadcast %49 : vector<16x1xf32> to vector<16x32xf32>
    %51 = arith.subf %45, %50 : vector<16x32xf32>
    %52 = arith.mulf %51, %51 : vector<16x32xf32>
    %cst_27 = arith.constant dense<0.000000e+00> : vector<16xf32>
    %53 = vector.multi_reduction <add>, %52, %cst_27 [1] : vector<16x32xf32> to vector<16xf32>
    %54 = vector.shape_cast %53 : vector<16xf32> to vector<16x1xf32>
    %cst_28 = arith.constant 3.200000e+01 : f32
    %55 = vector.broadcast %cst_28 : f32 to vector<16x1xf32>
    %56 = arith.divf %54, %55 : vector<16x1xf32>
    %cst_29 = arith.constant 9.99999996E-13 : f32
    %57 = vector.broadcast %cst_29 : f32 to vector<16x1xf32>
    %58 = arith.addf %56, %57 : vector<16x1xf32>
    %59 = math.rsqrt %58 : vector<16x1xf32>
    %60 = vector.broadcast %59 : vector<16x1xf32> to vector<16x32xf32>
    %61 = arith.mulf %51, %60 : vector<16x32xf32>
    %62 = vector.broadcast %9 : vector<1x32xf32> to vector<16x32xf32>
    %63 = arith.mulf %62, %61 : vector<16x32xf32>
    %64 = vector.broadcast %10 : vector<1x32xf32> to vector<16x32xf32>
    %65 = arith.addf %63, %64 : vector<16x32xf32>
    %c0_30 = arith.constant 0 : index
    %c0_31 = arith.constant 0 : index
    %c0_32 = arith.constant 0 : index
    %66 = vector.load %arg7[%c0_30, %c0_31, %c0_32] : memref<2x32x64xf32, #tpu.memory_space<vmem>>, vector<1x32x64xf32>
    %67 = vector.shape_cast %66 : vector<1x32x64xf32> to vector<32x64xf32>
    %cst_33 = arith.constant dense<0.000000e+00> : vector<16x64xf32>
    %68 = tpu.matmul %65, %67, %cst_33 {dimension_numbers = #tpu.dot_dimension_numbers<[1], [0], [0], [1], [0, 0, 1, 1], [], []>} : vector<16x32xf32>, vector<32x64xf32>, vector<16x64xf32> -> vector<16x64xf32>
    %69 = vector.broadcast %11 : vector<1x64xf32> to vector<16x64xf32>
    %70 = arith.addf %68, %69 : vector<16x64xf32>
    %cst_34 = arith.constant 5.000000e-01 : f32
    %71 = vector.broadcast %cst_34 : f32 to vector<16x64xf32>
    %72 = arith.mulf %70, %71 : vector<16x64xf32>
    %cst_35 = arith.constant 1.41421354 : f32
    %73 = vector.broadcast %cst_35 : f32 to vector<16x64xf32>
    %74 = arith.divf %70, %73 : vector<16x64xf32>
    %75 = math.erf %74 : vector<16x64xf32>
    %cst_36 = arith.constant 1.000000e+00 : f32
    %76 = vector.broadcast %cst_36 : f32 to vector<16x64xf32>
    %77 = arith.addf %76, %75 : vector<16x64xf32>
    %78 = arith.mulf %72, %77 : vector<16x64xf32>
    %c0_37 = arith.constant 0 : index
    %c0_38 = arith.constant 0 : index
    %c0_39 = arith.constant 0 : index
    %79 = vector.load %arg8[%c0_37, %c0_38, %c0_39] : memref<2x64x32xf32, #tpu.memory_space<vmem>>, vector<1x64x32xf32>
    %80 = vector.shape_cast %79 : vector<1x64x32xf32> to vector<64x32xf32>
    %cst_40 = arith.constant dense<0.000000e+00> : vector<16x32xf32>
    %81 = tpu.matmul %78, %80, %cst_40 {dimension_numbers = #tpu.dot_dimension_numbers<[1], [0], [0], [1], [0, 0, 1, 1], [], []>} : vector<16x64xf32>, vector<64x32xf32>, vector<16x32xf32> -> vector<16x32xf32>
    %82 = vector.broadcast %12 : vector<1x32xf32> to vector<16x32xf32>
    %83 = arith.addf %81, %82 : vector<16x32xf32>
    %84 = arith.addf %83, %65 : vector<16x32xf32>
    %cst_41 = arith.constant dense<0.000000e+00> : vector<16xf32>
    %85 = vector.multi_reduction <add>, %84, %cst_41 [1] : vector<16x32xf32> to vector<16xf32>
    %86 = vector.shape_cast %85 : vector<16xf32> to vector<16x1xf32>
    %cst_42 = arith.constant 3.200000e+01 : f32
    %87 = vector.broadcast %cst_42 : f32 to vector<16x1xf32>
    %88 = arith.divf %86, %87 : vector<16x1xf32>
    %89 = vector.broadcast %88 : vector<16x1xf32> to vector<16x32xf32>
    %90 = arith.subf %84, %89 : vector<16x32xf32>
    %91 = arith.mulf %90, %90 : vector<16x32xf32>
    %cst_43 = arith.constant dense<0.000000e+00> : vector<16xf32>
    %92 = vector.multi_reduction <add>, %91, %cst_43 [1] : vector<16x32xf32> to vector<16xf32>
    %93 = vector.shape_cast %92 : vector<16xf32> to vector<16x1xf32>
    %cst_44 = arith.constant 3.200000e+01 : f32
    %94 = vector.broadcast %cst_44 : f32 to vector<16x1xf32>
    %95 = arith.divf %93, %94 : vector<16x1xf32>
    %cst_45 = arith.constant 9.99999996E-13 : f32
    %96 = vector.broadcast %cst_45 : f32 to vector<16x1xf32>
    %97 = arith.addf %95, %96 : vector<16x1xf32>
    %98 = math.rsqrt %97 : vector<16x1xf32>
    %99 = vector.broadcast %98 : vector<16x1xf32> to vector<16x32xf32>
    %100 = arith.mulf %90, %99 : vector<16x32xf32>
    %101 = vector.broadcast %13 : vector<1x32xf32> to vector<16x32xf32>
    %102 = arith.mulf %101, %100 : vector<16x32xf32>
    %103 = vector.broadcast %14 : vector<1x32xf32> to vector<16x32xf32>
    %104 = arith.addf %102, %103 : vector<16x32xf32>
    %c0_46 = arith.constant 0 : index
    %c0_47 = arith.constant 0 : index
    %c0_48 = arith.constant 0 : index
    %105 = vector.load %arg10[%c0_46, %c0_47, %c0_48] : memref<2x16x32xf32, #tpu.memory_space<vmem>>, vector<1x16x32xf32>
    %106 = vector.shape_cast %105 : vector<1x16x32xf32> to vector<16x32xf32>
    %107 = vector.shape_cast %104 : vector<16x32xf32> to vector<1x16x32xf32>
    tpu.vector_store %arg10[%c0_46, %c0_47, %c0_48], %107 {strides = array<i32>} : memref<2x16x32xf32, #tpu.memory_space<vmem>>, vector<1x16x32xf32>,
    %c1 = arith.constant 1 : index
    %c0_49 = arith.constant 0 : index
    %c0_50 = arith.constant 0 : index
    %108 = vector.load %arg9[%c1, %c0_49, %c0_50] : memref<2x8x128xf32, #tpu.memory_space<vmem>>, vector<1x8x128xf32>
    %109 = vector.shape_cast %108 : vector<1x8x128xf32> to vector<8x128xf32>
    %110 = vector.extract_strided_slice %109 {offsets = [0, 0], sizes = [1, 96], strides = [1, 1]} : vector<8x128xf32> to vector<1x96xf32>
    %111 = vector.extract_strided_slice %109 {offsets = [1, 0], sizes = [1, 32], strides = [1, 1]} : vector<8x128xf32> to vector<1x32xf32>
    %112 = vector.extract_strided_slice %109 {offsets = [2, 0], sizes = [1, 32], strides = [1, 1]} : vector<8x128xf32> to vector<1x32xf32>
    %113 = vector.extract_strided_slice %109 {offsets = [3, 0], sizes = [1, 32], strides = [1, 1]} : vector<8x128xf32> to vector<1x32xf32>
    %114 = vector.extract_strided_slice %109 {offsets = [4, 0], sizes = [1, 64], strides = [1, 1]} : vector<8x128xf32> to vector<1x64xf32>
    %115 = vector.extract_strided_slice %109 {offsets = [5, 0], sizes = [1, 32], strides = [1, 1]} : vector<8x128xf32> to vector<1x32xf32>
    %116 = vector.extract_strided_slice %109 {offsets = [6, 0], sizes = [1, 32], strides = [1, 1]} : vector<8x128xf32> to vector<1x32xf32>
    %117 = vector.extract_strided_slice %109 {offsets = [7, 0], sizes = [1, 32], strides = [1, 1]} : vector<8x128xf32> to vector<1x32xf32>
    %c1_51 = arith.constant 1 : index
    %c0_52 = arith.constant 0 : index
    %c0_53 = arith.constant 0 : index
    %118 = vector.load %arg5[%c1_51, %c0_52, %c0_53] : memref<2x32x96xf32, #tpu.memory_space<vmem>>, vector<1x32x96xf32>
    %119 = vector.shape_cast %118 : vector<1x32x96xf32> to vector<32x96xf32>
    %cst_54 = arith.constant dense<0.000000e+00> : vector<16x96xf32>
    %120 = tpu.matmul %104, %119, %cst_54 {dimension_numbers = #tpu.dot_dimension_numbers<[1], [0], [0], [1], [0, 0, 1, 1], [], []>} : vector<16x32xf32>, vector<32x96xf32>, vector<16x96xf32> -> vector<16x96xf32>
    %121 = vector.broadcast %110 : vector<1x96xf32> to vector<16x96xf32>
    %122 = arith.addf %120, %121 : vector<16x96xf32>
    %123 = vector.extract_strided_slice %122 {offsets = [0, 0], sizes = [16, 32], strides = [1, 1]} : vector<16x96xf32> to vector<16x32xf32>
    %124 = vector.extract_strided_slice %122 {offsets = [0, 32], sizes = [16, 32], strides = [1, 1]} : vector<16x96xf32> to vector<16x32xf32>
    %125 = vector.extract_strided_slice %122 {offsets = [0, 64], sizes = [16, 32], strides = [1, 1]} : vector<16x96xf32> to vector<16x32xf32>
    %cst_55 = arith.constant dense<0.000000e+00> : vector<64x32xf32>
    %126 = tpu.matmul %2, %123, %cst_55 {dimension_numbers = #tpu.dot_dimension_numbers<[1], [0], [0], [1], [0, 0, 1, 1], [], []>} : vector<64x16xf32>, vector<16x32xf32>, vector<64x32xf32> -> vector<64x32xf32>
    %127 = arith.mulf %126, %0 : vector<64x32xf32>
    %cst_56 = arith.constant dense<0.000000e+00> : vector<64x16xf32>
    %128 = tpu.matmul %127, %124, %cst_56 {dimension_numbers = #tpu.dot_dimension_numbers<[1], [1], [0], [0], [0, 0, 1, 0], [], []>} : vector<64x32xf32>, vector<16x32xf32>, vector<64x16xf32> -> vector<64x16xf32>
    %129 = arith.addf %128, %1 : vector<64x16xf32>
    %cst_57 = arith.constant dense<0xFF800000> : vector<64xf32>
    %130 = vector.multi_reduction <maximumf>, %129, %cst_57 [1] : vector<64x16xf32> to vector<64xf32>
    %131 = vector.shape_cast %130 : vector<64xf32> to vector<64x1xf32>
    %132 = vector.broadcast %131 : vector<64x1xf32> to vector<64x16xf32>
    %133 = arith.subf %129, %132 : vector<64x16xf32>
    %134 = math.exp %133 : vector<64x16xf32>
    %cst_58 = arith.constant dense<0.000000e+00> : vector<64xf32>
    %135 = vector.multi_reduction <add>, %134, %cst_58 [1] : vector<64x16xf32> to vector<64xf32>
    %136 = vector.shape_cast %135 : vector<64xf32> to vector<64x1xf32>
    %137 = tpu.reciprocal %136 {approx = true} : vector<64x1xf32> -> vector<64x1xf32>
    %138 = vector.broadcast %137 : vector<64x1xf32> to vector<64x16xf32>
    %139 = arith.mulf %134, %138 : vector<64x16xf32>
    %cst_59 = arith.constant dense<0.000000e+00> : vector<64x32xf32>
    %140 = tpu.matmul %139, %125, %cst_59 {dimension_numbers = #tpu.dot_dimension_numbers<[1], [0], [0], [1], [0, 0, 1, 1], [], []>} : vector<64x16xf32>, vector<16x32xf32>, vector<64x32xf32> -> vector<64x32xf32>
    %141 = arith.mulf %140, %0 : vector<64x32xf32>
    %cst_60 = arith.constant dense<0.000000e+00> : vector<16x32xf32>
    %142 = tpu.matmul %3, %141, %cst_60 {dimension_numbers = #tpu.dot_dimension_numbers<[1], [0], [0], [1], [0, 0, 1, 1], [], []>} : vector<16x64xf32>, vector<64x32xf32>, vector<16x32xf32> -> vector<16x32xf32>
    %c1_61 = arith.constant 1 : index
    %c0_62 = arith.constant 0 : index
    %c0_63 = arith.constant 0 : index
    %143 = vector.load %arg6[%c1_61, %c0_62, %c0_63] : memref<2x32x32xf32, #tpu.memory_space<vmem>>, vector<1x32x32xf32>
    %144 = vector.shape_cast %143 : vector<1x32x32xf32> to vector<32x32xf32>
    %cst_64 = arith.constant dense<0.000000e+00> : vector<16x32xf32>
    %145 = tpu.matmul %142, %144, %cst_64 {dimension_numbers = #tpu.dot_dimension_numbers<[1], [0], [0], [1], [0, 0, 1, 1], [], []>} : vector<16x32xf32>, vector<32x32xf32>, vector<16x32xf32> -> vector<16x32xf32>
    %146 = vector.broadcast %111 : vector<1x32xf32> to vector<16x32xf32>
    %147 = arith.addf %145, %146 : vector<16x32xf32>
    %148 = arith.addf %147, %104 : vector<16x32xf32>
    %cst_65 = arith.constant dense<0.000000e+00> : vector<16xf32>
    %149 = vector.multi_reduction <add>, %148, %cst_65 [1] : vector<16x32xf32> to vector<16xf32>
    %150 = vector.shape_cast %149 : vector<16xf32> to vector<16x1xf32>
    %cst_66 = arith.constant 3.200000e+01 : f32
    %151 = vector.broadcast %cst_66 : f32 to vector<16x1xf32>
    %152 = arith.divf %150, %151 : vector<16x1xf32>
    %153 = vector.broadcast %152 : vector<16x1xf32> to vector<16x32xf32>
    %154 = arith.subf %148, %153 : vector<16x32xf32>
    %155 = arith.mulf %154, %154 : vector<16x32xf32>
    %cst_67 = arith.constant dense<0.000000e+00> : vector<16xf32>
    %156 = vector.multi_reduction <add>, %155, %cst_67 [1] : vector<16x32xf32> to vector<16xf32>
    %157 = vector.shape_cast %156 : vector<16xf32> to vector<16x1xf32>
    %cst_68 = arith.constant 3.200000e+01 : f32
    %158 = vector.broadcast %cst_68 : f32 to vector<16x1xf32>
    %159 = arith.divf %157, %158 : vector<16x1xf32>
    %cst_69 = arith.constant 9.99999996E-13 : f32
    %160 = vector.broadcast %cst_69 : f32 to vector<16x1xf32>
    %161 = arith.addf %159, %160 : vector<16x1xf32>
    %162 = math.rsqrt %161 : vector<16x1xf32>
    %163 = vector.broadcast %162 : vector<16x1xf32> to vector<16x32xf32>
    %164 = arith.mulf %154, %163 : vector<16x32xf32>
    %165 = vector.broadcast %112 : vector<1x32xf32> to vector<16x32xf32>
    %166 = arith.mulf %165, %164 : vector<16x32xf32>
    %167 = vector.broadcast %113 : vector<1x32xf32> to vector<16x32xf32>
    %168 = arith.addf %166, %167 : vector<16x32xf32>
    %c1_70 = arith.constant 1 : index
    %c0_71 = arith.constant 0 : index
    %c0_72 = arith.constant 0 : index
    %169 = vector.load %arg7[%c1_70, %c0_71, %c0_72] : memref<2x32x64xf32, #tpu.memory_space<vmem>>, vector<1x32x64xf32>
    %170 = vector.shape_cast %169 : vector<1x32x64xf32> to vector<32x64xf32>
    %cst_73 = arith.constant dense<0.000000e+00> : vector<16x64xf32>
    %171 = tpu.matmul %168, %170, %cst_73 {dimension_numbers = #tpu.dot_dimension_numbers<[1], [0], [0], [1], [0, 0, 1, 1], [], []>} : vector<16x32xf32>, vector<32x64xf32>, vector<16x64xf32> -> vector<16x64xf32>
    %172 = vector.broadcast %114 : vector<1x64xf32> to vector<16x64xf32>
    %173 = arith.addf %171, %172 : vector<16x64xf32>
    %cst_74 = arith.constant 5.000000e-01 : f32
    %174 = vector.broadcast %cst_74 : f32 to vector<16x64xf32>
    %175 = arith.mulf %173, %174 : vector<16x64xf32>
    %cst_75 = arith.constant 1.41421354 : f32
    %176 = vector.broadcast %cst_75 : f32 to vector<16x64xf32>
    %177 = arith.divf %173, %176 : vector<16x64xf32>
    %178 = math.erf %177 : vector<16x64xf32>
    %cst_76 = arith.constant 1.000000e+00 : f32
    %179 = vector.broadcast %cst_76 : f32 to vector<16x64xf32>
    %180 = arith.addf %179, %178 : vector<16x64xf32>
    %181 = arith.mulf %175, %180 : vector<16x64xf32>
    %c1_77 = arith.constant 1 : index
    %c0_78 = arith.constant 0 : index
    %c0_79 = arith.constant 0 : index
    %182 = vector.load %arg8[%c1_77, %c0_78, %c0_79] : memref<2x64x32xf32, #tpu.memory_space<vmem>>, vector<1x64x32xf32>
    %183 = vector.shape_cast %182 : vector<1x64x32xf32> to vector<64x32xf32>
    %cst_80 = arith.constant dense<0.000000e+00> : vector<16x32xf32>
    %184 = tpu.matmul %181, %183, %cst_80 {dimension_numbers = #tpu.dot_dimension_numbers<[1], [0], [0], [1], [0, 0, 1, 1], [], []>} : vector<16x64xf32>, vector<64x32xf32>, vector<16x32xf32> -> vector<16x32xf32>
    %185 = vector.broadcast %115 : vector<1x32xf32> to vector<16x32xf32>
    %186 = arith.addf %184, %185 : vector<16x32xf32>
    %187 = arith.addf %186, %168 : vector<16x32xf32>
    %cst_81 = arith.constant dense<0.000000e+00> : vector<16xf32>
    %188 = vector.multi_reduction <add>, %187, %cst_81 [1] : vector<16x32xf32> to vector<16xf32>
    %189 = vector.shape_cast %188 : vector<16xf32> to vector<16x1xf32>
    %cst_82 = arith.constant 3.200000e+01 : f32
    %190 = vector.broadcast %cst_82 : f32 to vector<16x1xf32>
    %191 = arith.divf %189, %190 : vector<16x1xf32>
    %192 = vector.broadcast %191 : vector<16x1xf32> to vector<16x32xf32>
    %193 = arith.subf %187, %192 : vector<16x32xf32>
    %194 = arith.mulf %193, %193 : vector<16x32xf32>
    %cst_83 = arith.constant dense<0.000000e+00> : vector<16xf32>
    %195 = vector.multi_reduction <add>, %194, %cst_83 [1] : vector<16x32xf32> to vector<16xf32>
    %196 = vector.shape_cast %195 : vector<16xf32> to vector<16x1xf32>
    %cst_84 = arith.constant 3.200000e+01 : f32
    %197 = vector.broadcast %cst_84 : f32 to vector<16x1xf32>
    %198 = arith.divf %196, %197 : vector<16x1xf32>
    %cst_85 = arith.constant 9.99999996E-13 : f32
    %199 = vector.broadcast %cst_85 : f32 to vector<16x1xf32>
    %200 = arith.addf %198, %199 : vector<16x1xf32>
    %201 = math.rsqrt %200 : vector<16x1xf32>
    %202 = vector.broadcast %201 : vector<16x1xf32> to vector<16x32xf32>
    %203 = arith.mulf %193, %202 : vector<16x32xf32>
    %204 = vector.broadcast %116 : vector<1x32xf32> to vector<16x32xf32>
    %205 = arith.mulf %204, %203 : vector<16x32xf32>
    %206 = vector.broadcast %117 : vector<1x32xf32> to vector<16x32xf32>
    %207 = arith.addf %205, %206 : vector<16x32xf32>
    %c1_86 = arith.constant 1 : index
    %c0_87 = arith.constant 0 : index
    %c0_88 = arith.constant 0 : index
    %208 = vector.load %arg10[%c1_86, %c0_87, %c0_88] : memref<2x16x32xf32, #tpu.memory_space<vmem>>, vector<1x16x32xf32>
    %209 = vector.shape_cast %208 : vector<1x16x32xf32> to vector<16x32xf32>
    %210 = vector.shape_cast %207 : vector<16x32xf32> to vector<1x16x32xf32>
    tpu.vector_store %arg10[%c1_86, %c0_87, %c0_88], %210 {strides = array<i32>} : memref<2x16x32xf32, #tpu.memory_space<vmem>>, vector<1x16x32xf32>,
    return
  }
}

</mosaic_0001>

<llo_original>
// kernel: tpu_custom_call.1
$region0: #{tpu_custom_call.1}
  #allocation0 [shape = 'u32[]', space=smem, size = 0x4, offset = 0x4, fixed_abs, tag = 'smem constant byte address 0x4 - core index']
  #allocation1 [shape = 'u32[144,128]{1,0:T(1,128)}', space=vmem, size = 0x12000, scoped, tag = 'internal scratch']
  %s0 = inlined_call_operand.vmem [shape: f32[16,32], index: 0, kind: input, shape index: {}]
  %s1 = inlined_call_operand.vmem [shape: f32[64,16], index: 1, kind: input, shape index: {}]
  %s2 = inlined_call_operand.vmem [shape: f32[64,32], index: 2, kind: input, shape index: {}]
  %s3 = inlined_call_operand.vmem [shape: f32[64,16], index: 3, kind: input, shape index: {}]
  %s4 = inlined_call_operand.vmem [shape: f32[16,64], index: 4, kind: input, shape index: {}]
  %s5 = inlined_call_operand.vmem [shape: f32[2,32,96], index: 5, kind: input, shape index: {}]
  %s6 = inlined_call_operand.vmem [shape: f32[2,32,32], index: 6, kind: input, shape index: {}]
  %s7 = inlined_call_operand.vmem [shape: f32[2,32,64], index: 7, kind: input, shape index: {}]
  %s8 = inlined_call_operand.vmem [shape: f32[2,64,32], index: 8, kind: input, shape index: {}]
  %s9 = inlined_call_operand.vmem [shape: f32[2,8,128], index: 9, kind: input, shape index: {}]
  %s10 = inlined_call_operand.hbm [shape: f32[2,16,32], index: 10, kind: output, shape index: {}]
  %s11 = sld [smem:[#allocation0]]
  $region50: #{tpu_custom_call.1} parent=0
    _
  %s13 = ssub.s32 1, %s11
  %s14 = scalar_select 0, %s13, %s11
  $region1: #{tpu_custom_call.1} parent=0
    #allocation2 [shape = 'u8[16384]{0}', space=vmem, size = 0x4000, scoped, tag = 'output window, operand 0, single buffered']
    #allocation3 [shape = 's32[1]{0}', space=sflag, size = 0x4, scoped, tag = 'scoped memory for tpu_custom_call.1']
    %15 = vsyncpa [#allocation3], 0
    // Predicated region
    $region2: #{tpu_custom_call.1} parent=1 // pred_check
      _
    $region3: #{tpu_custom_call.1} parent=1 // pred_check_branch
      %17 = sbr.rel (0) target = $region5
    $region4: #{tpu_custom_call.1} parent=1 // pred_region
      _
    $region5: #{tpu_custom_call.1} parent=1 // pred_fallthru
      _
    // Predicated region
    $region6: #{tpu_custom_call.1} parent=1 // pred_check
      _
    $region7: #{tpu_custom_call.1} parent=1 // pred_check_branch
      %19 = sbr.rel (0) target = $region9
    $region8: #{tpu_custom_call.1} parent=1 // pred_region
      _
    $region9: #{tpu_custom_call.1} parent=1 // pred_fallthru
      _
    // Predicated region
    $region10: #{tpu_custom_call.1} parent=1 // pred_check
      _
    $region11: #{tpu_custom_call.1} parent=1 // pred_check_branch
      %21 = sbr.rel (0) target = $region13
    $region12: #{tpu_custom_call.1} parent=1 // pred_region
      _
    $region13: #{tpu_custom_call.1} parent=1 // pred_fallthru
      _
    // Predicated region
    $region14: #{tpu_custom_call.1} parent=1 // pred_check
      _
    $region15: #{tpu_custom_call.1} parent=1 // pred_check_branch
      %23 = sbr.rel (0) target = $region17
    $region16: #{tpu_custom_call.1} parent=1 // pred_region
      _
    $region17: #{tpu_custom_call.1} parent=1 // pred_fallthru
      _
    // Predicated region
    $region18: #{tpu_custom_call.1} parent=1 // pred_check
      _
    $region19: #{tpu_custom_call.1} parent=1 // pred_check_branch
      %25 = sbr.rel (0) target = $region21
    $region20: #{tpu_custom_call.1} parent=1 // pred_region
      _
    $region21: #{tpu_custom_call.1} parent=1 // pred_fallthru
      _
    // Predicated region
    $region22: #{tpu_custom_call.1} parent=1 // pred_check
      _
    $region23: #{tpu_custom_call.1} parent=1 // pred_check_branch
      %27 = sbr.rel (0) target = $region25
    $region24: #{tpu_custom_call.1} parent=1 // pred_region
      _
    $region25: #{tpu_custom_call.1} parent=1 // pred_fallthru
      _
    // Predicated region
    $region26: #{tpu_custom_call.1} parent=1 // pred_check
      _
    $region27: #{tpu_custom_call.1} parent=1 // pred_check_branch
      %29 = sbr.rel (0) target = $region29
    $region28: #{tpu_custom_call.1} parent=1 // pred_region
      _
    $region29: #{tpu_custom_call.1} parent=1 // pred_fallthru
      _
    // Predicated region
    $region30: #{tpu_custom_call.1} parent=1 // pred_check
      _
    $region31: #{tpu_custom_call.1} parent=1 // pred_check_branch
      %31 = sbr.rel (0) target = $region33
    $region32: #{tpu_custom_call.1} parent=1 // pred_region
      _
    $region33: #{tpu_custom_call.1} parent=1 // pred_fallthru
      _
    // Predicated region
    $region34: #{tpu_custom_call.1} parent=1 // pred_check
      _
    $region35: #{tpu_custom_call.1} parent=1 // pred_check_branch
      %33 = sbr.rel (0) target = $region37
    $region36: #{tpu_custom_call.1} parent=1 // pred_region
      _
    $region37: #{tpu_custom_call.1} parent=1 // pred_fallthru
      _
    // Predicated region
    $region38: #{tpu_custom_call.1} parent=1 // pred_check
      _
    $region39: #{tpu_custom_call.1} parent=1 // pred_check_branch
      %35 = sbr.rel (0) target = $region41
    $region40: #{tpu_custom_call.1} parent=1 // pred_region
      _
    $region41: #{tpu_custom_call.1} parent=1 // pred_fallthru
      _
    %v36 = vld [vmem:[%s2] sm:$0xff]
    %v37 = vld [vmem:[%s2 + $0x8] sm:$0xff]
    %v38 = vld [vmem:[%s2 + $0x10] sm:$0xff]
    %v39 = vld [vmem:[%s2 + $0x18] sm:$0xff]
    %v40 = vld [vmem:[%s2 + $0x20] sm:$0xff]
    %v41 = vld [vmem:[%s2 + $0x28] sm:$0xff]
    %v42 = vld [vmem:[%s2 + $0x30] sm:$0xff]
    %v43 = vld [vmem:[%s2 + $0x38] sm:$0xff]
    %v44 = vld [vmem:[%s1] sm:$0xff]
    %v45 = vld [vmem:[%s1 + $0x8] sm:$0xff]
    %v46 = vld [vmem:[%s1 + $0x10] sm:$0xff]
    %v47 = vld [vmem:[%s1 + $0x18] sm:$0xff]
    %v48 = vld [vmem:[%s1 + $0x20] sm:$0xff]
    %v49 = vld [vmem:[%s1 + $0x28] sm:$0xff]
    %v50 = vld [vmem:[%s1 + $0x30] sm:$0xff]
    %v51 = vld [vmem:[%s1 + $0x38] sm:$0xff]
    %v52 = vld [vmem:[%s3] sm:$0xff]
    %v53 = vld [vmem:[%s3 + $0x8] sm:$0xff]
    %v54 = vld [vmem:[%s3 + $0x10] sm:$0xff]
    %v55 = vld [vmem:[%s3 + $0x18] sm:$0xff]
    %v56 = vld [vmem:[%s3 + $0x20] sm:$0xff]
    %v57 = vld [vmem:[%s3 + $0x28] sm:$0xff]
    %v58 = vld [vmem:[%s3 + $0x30] sm:$0xff]
    %v59 = vld [vmem:[%s3 + $0x38] sm:$0xff]
    %v60 = vld [vmem:[%s4] sm:$0xff]
    %v61 = vld [vmem:[%s4 + $0x8] sm:$0xff]
    %v62 = vld [vmem:[%s0] sm:$0xff]
    %v63 = vld [vmem:[%s0 + $0x8] sm:$0xff]
    %v64 = vld [vmem:[%s9] sm:$0xff]
    %v65 = vld [vmem:[%s5] sm:$0xff]
    %v66 = vld [vmem:[%s5 + $0x8] sm:$0xff]
    %v67 = vld [vmem:[%s5 + $0x10] sm:$0xff]
    %v68 = vld [vmem:[%s5 + $0x18] sm:$0xff]
    %v69 = vlaneseq
    %v70 = vshrl.u32 %v69, 7
    %v71 = vsub.s32 0, %v70
    %v72 = vrot.slane %v64, %v71
    %vm73 = vcmask 261120
    %v75 = vsel %vm73, %v62, 0
    %v78 = vsel %vm73, %v63, 0
    %80 = vmatprep.subr.mxu0 0.0
    %81 = vmatpush1.msra.mxu0 0.0
    %82 = vmatprep.subr.mxu0 0.0
    %83 = vmatpush1.msra.mxu0 0.0
    %84 = vmatprep.subr.mxu0 0.0
    %85 = vmatpush1.msra.mxu0 0.0
    %86 = vmatprep.subr.mxu0 0.0
    %87 = vmatpush1.msra.mxu0 0.0
    %88 = vmatprep.subr.mxu0 0.0
    %89 = vmatpush1.msra.mxu0 0.0
    %90 = vmatprep.subr.mxu0 0.0
    %91 = vmatpush1.msra.mxu0 0.0
    %92 = vmatprep.subr.mxu0 0.0
    %93 = vmatpush1.msra.mxu0 0.0
    %94 = vmatprep.subr.mxu0 0.0
    %95 = vmatpush1.msra.mxu0 0.0
    %96 = vmatprep.subr.mxu0 0.0
    %97 = vmatpush1.msra.mxu0 0.0
    %98 = vmatprep.subr.mxu0 0.0
    %99 = vmatpush1.msra.mxu0 0.0
    %100 = vmatprep.subr.mxu0 0.0
    %101 = vmatpush1.msra.mxu0 0.0
    %102 = vmatprep.subr.mxu0 0.0
    %103 = vmatpush1.msra.mxu0 0.0
    %104 = vmatprep.subr.mxu0 0.0
    %105 = vmatpush1.msra.mxu0 %v68
    %106 = vmatprep.subr.mxu0 0.0
    %107 = vmatpush1.msra.mxu0 %v67
    %108 = vmatprep.subr.mxu0 0.0
    %109 = vmatpush1.msra.mxu0 %v66
    %110 = vmatprep.subr.mxu0 0.0
    %111 = vmatpush1.msra.mxu0 %v65
    %112 = vmatprep.subr.mxu0 0.0
    %113 = vmatpush2.msra.mxu0 0.0
    %114 = vmatprep.subr.mxu0 0.0
    %115 = vmatpush2.msra.mxu0 0.0
    %116 = vmatprep.subr.mxu0 0.0
    %117 = vmatpush2.msra.mxu0 0.0
    %118 = vmatprep.subr.mxu0 0.0
    %119 = vmatpush2.msra.mxu0 0.0
    %120 = vmatprep.subr.mxu0 0.0
    %121 = vmatpush2.msra.mxu0 0.0
    %122 = vmatprep.subr.mxu0 0.0
    %123 = vmatpush2.msra.mxu0 0.0
    %124 = vmatprep.subr.mxu0 0.0
    %125 = vmatpush2.msra.mxu0 0.0
    %126 = vmatprep.subr.mxu0 0.0
    %127 = vmatpush2.msra.mxu0 0.0
    %128 = vmatprep.subr.mxu0 0.0
    %129 = vmatpush2.msra.mxu0 0.0
    %130 = vmatprep.subr.mxu0 0.0
    %131 = vmatpush2.msra.mxu0 0.0
    %132 = vmatprep.subr.mxu0 0.0
    %133 = vmatpush2.msra.mxu0 0.0
    %134 = vmatprep.subr.mxu0 0.0
    %135 = vmatpush2.msra.mxu0 0.0
    %136 = vmatprep.subr.mxu0 0.0
    %137 = vmatpush2.msra.mxu0 0.0
    %138 = vmatprep.subr.mxu0 0.0
    %139 = vmatpush2.msra.mxu0 0.0
    %140 = vmatprep.subr.mxu0 0.0
    %141 = vmatpush2.msra.mxu0 0.0
    %142 = vmatprep.subr.mxu0 0.0
    %143 = vmatpush2.msra.mxu0 0.0
    %144 = vmatprep.mubr.f32.mxu0 0.0
    %145 = vmatmul.mubr.f32.gmra.mxu0 %v75
    %v146 = vpop.f32.mrf.mxu0
    %v147 = vadd.f32 %v72, %v146
    %v148 = vpop.f32.mrf.mxu0
    %149 = vmatprep.mubr.f32.mxu0 0.0
    %150 = vmatmul.mubr.f32.gmra.mxu0 %v78
    %v151 = vpop.f32.mrf.mxu0
    %v152 = vadd.f32 %v72, %v151
    %v153 = vpop.f32.mrf.mxu0
    %154 = vdwg.mxu0
    %vm155 = vcmask 130048
    %v157 = vsel %vm155, %v52, 0
    %v160 = vsel %vm155, %v53, 0
    %v163 = vsel %vm155, %v54, 0
    %v166 = vsel %vm155, %v55, 0
    %v169 = vsel %vm155, %v56, 0
    %v172 = vsel %vm155, %v57, 0
    %v175 = vsel %vm155, %v58, 0
    %v178 = vsel %vm155, %v59, 0
    %180 = vmatprep.subr.mxu0 0.0
    %181 = vmatpush1.msra.mxu0 0.0
    %182 = vmatprep.subr.mxu0 0.0
    %183 = vmatpush1.msra.mxu0 0.0
    %184 = vmatprep.subr.mxu0 0.0
    %185 = vmatpush1.msra.mxu0 0.0
    %186 = vmatprep.subr.mxu0 0.0
    %187 = vmatpush1.msra.mxu0 0.0
    %188 = vmatprep.subr.mxu0 0.0
    %189 = vmatpush1.msra.mxu0 0.0
    %190 = vmatprep.subr.mxu0 0.0
    %191 = vmatpush1.msra.mxu0 0.0
    %192 = vmatprep.subr.mxu0 0.0
    %193 = vmatpush1.msra.mxu0 0.0
    %194 = vmatprep.subr.mxu0 0.0
    %195 = vmatpush1.msra.mxu0 0.0
    %196 = vmatprep.subr.mxu0 0.0
    %197 = vmatpush1.msra.mxu0 0.0
    %198 = vmatprep.subr.mxu0 0.0
    %199 = vmatpush1.msra.mxu0 0.0
    %200 = vmatprep.subr.mxu0 0.0
    %201 = vmatpush1.msra.mxu0 0.0
    %202 = vmatprep.subr.mxu0 0.0
    %203 = vmatpush1.msra.mxu0 0.0
    %204 = vmatprep.subr.mxu0 0.0
    %205 = vmatpush1.msra.mxu0 0.0
    %206 = vmatprep.subr.mxu0 0.0
    %207 = vmatpush1.msra.mxu0 0.0
    %208 = vmatprep.subr.mxu0 0.0
    %209 = vmatpush1.msra.mxu0 %v152
    %210 = vmatprep.subr.mxu0 0.0
    %211 = vmatpush1.msra.mxu0 %v147
    %212 = vmatprep.subr.mxu0 0.0
    %213 = vmatpush2.msra.mxu0 0.0
    %214 = vmatprep.subr.mxu0 0.0
    %215 = vmatpush2.msra.mxu0 0.0
    %216 = vmatprep.subr.mxu0 0.0
    %217 = vmatpush2.msra.mxu0 0.0
    %218 = vmatprep.subr.mxu0 0.0
    %219 = vmatpush2.msra.mxu0 0.0
    %220 = vmatprep.subr.mxu0 0.0
    %221 = vmatpush2.msra.mxu0 0.0
    %222 = vmatprep.subr.mxu0 0.0
    %223 = vmatpush2.msra.mxu0 0.0
    %224 = vmatprep.subr.mxu0 0.0
    %225 = vmatpush2.msra.mxu0 0.0
    %226 = vmatprep.subr.mxu0 0.0
    %227 = vmatpush2.msra.mxu0 0.0
    %228 = vmatprep.subr.mxu0 0.0
    %229 = vmatpush2.msra.mxu0 0.0
    %230 = vmatprep.subr.mxu0 0.0
    %231 = vmatpush2.msra.mxu0 0.0
    %232 = vmatprep.subr.mxu0 0.0
    %233 = vmatpush2.msra.mxu0 0.0
    %234 = vmatprep.subr.mxu0 0.0
    %235 = vmatpush2.msra.mxu0 0.0
    %236 = vmatprep.subr.mxu0 0.0
    %237 = vmatpush2.msra.mxu0 0.0
    %238 = vmatprep.subr.mxu0 0.0
    %239 = vmatpush2.msra.mxu0 0.0
    %240 = vmatprep.subr.mxu0 0.0
    %241 = vmatpush2.msra.mxu0 0.0
    %242 = vmatprep.subr.mxu0 0.0
    %243 = vmatpush2.msra.mxu0 0.0
    %244 = vmatprep.mubr.f32.mxu0 0.0
    %245 = vmatmul.mubr.f32.gmra.mxu0 %v157
    %v246 = vpop.f32.mrf.mxu0
    %v247 = vadd.f32 0.0, %v246
    %v248 = vpop.f32.mrf.mxu0
    %249 = vmatprep.mubr.f32.mxu0 0.0
    %250 = vmatmul.mubr.f32.gmra.mxu0 %v160
    %v251 = vpop.f32.mrf.mxu0
    %v252 = vadd.f32 0.0, %v251
    %v253 = vpop.f32.mrf.mxu0
    %254 = vmatprep.mubr.f32.mxu0 0.0
    %255 = vmatmul.mubr.f32.gmra.mxu0 %v163
    %v256 = vpop.f32.mrf.mxu0
    %v257 = vadd.f32 0.0, %v256
    %v258 = vpop.f32.mrf.mxu0
    %259 = vmatprep.mubr.f32.mxu0 0.0
    %260 = vmatmul.mubr.f32.gmra.mxu0 %v166
    %v261 = vpop.f32.mrf.mxu0
    %v262 = vadd.f32 0.0, %v261
    %v263 = vpop.f32.mrf.mxu0
    %264 = vmatprep.mubr.f32.mxu0 0.0
    %265 = vmatmul.mubr.f32.gmra.mxu0 %v169
    %v266 = vpop.f32.mrf.mxu0
    %v267 = vadd.f32 0.0, %v266
    %v268 = vpop.f32.mrf.mxu0
    %269 = vmatprep.mubr.f32.mxu0 0.0
    %270 = vmatmul.mubr.f32.gmra.mxu0 %v172
    %v271 = vpop.f32.mrf.mxu0
    %v272 = vadd.f32 0.0, %v271
    %v273 = vpop.f32.mrf.mxu0
    %274 = vmatprep.mubr.f32.mxu0 0.0
    %275 = vmatmul.mubr.f32.gmra.mxu0 %v175
    %v276 = vpop.f32.mrf.mxu0
    %v277 = vadd.f32 0.0, %v276
    %v278 = vpop.f32.mrf.mxu0
    %279 = vmatprep.mubr.f32.mxu0 0.0
    %280 = vmatmul.mubr.f32.gmra.mxu0 %v178
    %v281 = vpop.f32.mrf.mxu0
    %v282 = vadd.f32 0.0, %v281
    %v283 = vpop.f32.mrf.mxu0
    %284 = vdwg.mxu0
    %v285 = vmul.f32 %v247, %v36
    %v286 = vmul.f32 %v252, %v37
    %v287 = vmul.f32 %v257, %v38
    %v288 = vmul.f32 %v262, %v39
    %v289 = vmul.f32 %v267, %v40
    %v290 = vmul.f32 %v272, %v41
    %v291 = vmul.f32 %v277, %v42
    %v292 = vmul.f32 %v282, %v43
    %295 = vrot.lane.b32.xlu0 %v147, 96
    %v296 = vpop.permute.xlu0 %295
    %297 = vrot.lane.b32.xlu0 %v152, 96
    %v298 = vpop.permute.xlu0 %297
    %v300 = vsel %vm73, %v285, 0
    %v303 = vsel %vm73, %v286, 0
    %v306 = vsel %vm73, %v287, 0
    %v309 = vsel %vm73, %v288, 0
    %v312 = vsel %vm73, %v289, 0
    %v315 = vsel %vm73, %v290, 0
    %v318 = vsel %vm73, %v291, 0
    %v321 = vsel %vm73, %v292, 0
    %v323 = vsel %vm73, %v296, 0
    %v325 = vsel %vm73, %v298, 0
    %327 = vmatprep.subr.mxu0 0.0
    %328 = vmatpush1.xpose.msra.mxu0 0.0
    %329 = vmatprep.subr.mxu0 0.0
    %330 = vmatpush1.xpose.msra.mxu0 0.0
    %331 = vmatprep.subr.mxu0 0.0
    %332 = vmatpush1.xpose.msra.mxu0 0.0
    %333 = vmatprep.subr.mxu0 0.0
    %334 = vmatpush1.xpose.msra.mxu0 0.0
    %335 = vmatprep.subr.mxu0 0.0
    %336 = vmatpush1.xpose.msra.mxu0 0.0
    %337 = vmatprep.subr.mxu0 0.0
    %338 = vmatpush1.xpose.msra.mxu0 0.0
    %339 = vmatprep.subr.mxu0 0.0
    %340 = vmatpush1.xpose.msra.mxu0 0.0
    %341 = vmatprep.subr.mxu0 0.0
    %342 = vmatpush1.xpose.msra.mxu0 0.0
    %343 = vmatprep.subr.mxu0 0.0
    %344 = vmatpush1.xpose.msra.mxu0 0.0
    %345 = vmatprep.subr.mxu0 0.0
    %346 = vmatpush1.xpose.msra.mxu0 0.0
    %347 = vmatprep.subr.mxu0 0.0
    %348 = vmatpush1.xpose.msra.mxu0 0.0
    %349 = vmatprep.subr.mxu0 0.0
    %350 = vmatpush1.xpose.msra.mxu0 0.0
    %351 = vmatprep.subr.mxu0 0.0
    %352 = vmatpush1.xpose.msra.mxu0 0.0
    %353 = vmatprep.subr.mxu0 0.0
    %354 = vmatpush1.xpose.msra.mxu0 0.0
    %355 = vmatprep.subr.mxu0 0.0
    %356 = vmatpush1.xpose.msra.mxu0 %v325
    %357 = vmatprep.subr.mxu0 0.0
    %358 = vmatpush1.xpose.msra.mxu0 %v323
    %359 = vmatprep.subr.mxu0 0.0
    %360 = vmatpush2.xpose.msra.mxu0 0.0
    %361 = vmatprep.subr.mxu0 0.0
    %362 = vmatpush2.xpose.msra.mxu0 0.0
    %363 = vmatprep.subr.mxu0 0.0
    %364 = vmatpush2.xpose.msra.mxu0 0.0
    %365 = vmatprep.subr.mxu0 0.0
    %366 = vmatpush2.xpose.msra.mxu0 0.0
    %367 = vmatprep.subr.mxu0 0.0
    %368 = vmatpush2.xpose.msra.mxu0 0.0
    %369 = vmatprep.subr.mxu0 0.0
    %370 = vmatpush2.xpose.msra.mxu0 0.0
    %371 = vmatprep.subr.mxu0 0.0
    %372 = vmatpush2.xpose.msra.mxu0 0.0
    %373 = vmatprep.subr.mxu0 0.0
    %374 = vmatpush2.xpose.msra.mxu0 0.0
    %375 = vmatprep.subr.mxu0 0.0
    %376 = vmatpush2.xpose.msra.mxu0 0.0
    %377 = vmatprep.subr.mxu0 0.0
    %378 = vmatpush2.xpose.msra.mxu0 0.0
    %379 = vmatprep.subr.mxu0 0.0
    %380 = vmatpush2.xpose.msra.mxu0 0.0
    %381 = vmatprep.subr.mxu0 0.0
    %382 = vmatpush2.xpose.msra.mxu0 0.0
    %383 = vmatprep.subr.mxu0 0.0
    %384 = vmatpush2.xpose.msra.mxu0 0.0
    %385 = vmatprep.subr.mxu0 0.0
    %386 = vmatpush2.xpose.msra.mxu0 0.0
    %387 = vmatprep.subr.mxu0 0.0
    %388 = vmatpush2.xpose.msra.mxu0 0.0
    %389 = vmatprep.subr.mxu0 0.0
    %390 = vmatpush2.xpose.msra.mxu0 0.0
    %391 = vmatprep.mubr.f32.mxu0 0.0
    %392 = vmatmul.mubr.f32.gmra.mxu0 %v300
    %v393 = vpop.f32.mrf.mxu0
    %v394 = vadd.f32 %v44, %v393
    %v395 = vpop.f32.mrf.mxu0
    %396 = vmatprep.mubr.f32.mxu0 0.0
    %397 = vmatmul.mubr.f32.gmra.mxu0 %v303
    %v398 = vpop.f32.mrf.mxu0
    %v399 = vadd.f32 %v45, %v398
    %v400 = vpop.f32.mrf.mxu0
    %401 = vmatprep.mubr.f32.mxu0 0.0
    %402 = vmatmul.mubr.f32.gmra.mxu0 %v306
    %v403 = vpop.f32.mrf.mxu0
    %v404 = vadd.f32 %v46, %v403
    %v405 = vpop.f32.mrf.mxu0
    %406 = vmatprep.mubr.f32.mxu0 0.0
    %407 = vmatmul.mubr.f32.gmra.mxu0 %v309
    %v408 = vpop.f32.mrf.mxu0
    %v409 = vadd.f32 %v47, %v408
    %v410 = vpop.f32.mrf.mxu0
    %411 = vmatprep.mubr.f32.mxu0 0.0
    %412 = vmatmul.mubr.f32.gmra.mxu0 %v312
    %v413 = vpop.f32.mrf.mxu0
    %v414 = vadd.f32 %v48, %v413
    %v415 = vpop.f32.mrf.mxu0
    %416 = vmatprep.mubr.f32.mxu0 0.0
    %417 = vmatmul.mubr.f32.gmra.mxu0 %v315
    %v418 = vpop.f32.mrf.mxu0
    %v419 = vadd.f32 %v49, %v418
    %v420 = vpop.f32.mrf.mxu0
    %421 = vmatprep.mubr.f32.mxu0 0.0
    %422 = vmatmul.mubr.f32.gmra.mxu0 %v318
    %v423 = vpop.f32.mrf.mxu0
    %v424 = vadd.f32 %v50, %v423
    %v425 = vpop.f32.mrf.mxu0
    %426 = vmatprep.mubr.f32.mxu0 0.0
    %427 = vmatmul.mubr.f32.gmra.mxu0 %v321
    %v428 = vpop.f32.mrf.mxu0
    %v429 = vadd.f32 %v51, %v428
    %v430 = vpop.f32.mrf.mxu0
    %431 = vdwg.mxu0
    %v432 = vsel %vm155, %v394, -inf
    %433 = vmax.xlane.f32.xlu0 %v432
    %v434 = vpop.xlane.xlu0 %433
    %v435 = vsel %vm155, %v399, -inf
    %436 = vmax.xlane.f32.xlu0 %v435
    %v437 = vpop.xlane.xlu0 %436
    %v438 = vsel %vm155, %v404, -inf
    %439 = vmax.xlane.f32.xlu0 %v438
    %v440 = vpop.xlane.xlu0 %439
    %v441 = vsel %vm155, %v409, -inf
    %442 = vmax.xlane.f32.xlu0 %v441
    %v443 = vpop.xlane.xlu0 %442
    %v444 = vsel %vm155, %v414, -inf
    %445 = vmax.xlane.f32.xlu0 %v444
    %v446 = vpop.xlane.xlu0 %445
    %v447 = vsel %vm155, %v419, -inf
    %448 = vmax.xlane.f32.xlu0 %v447
    %v449 = vpop.xlane.xlu0 %448
    %v450 = vsel %vm155, %v424, -inf
    %451 = vmax.xlane.f32.xlu0 %v450
    %v452 = vpop.xlane.xlu0 %451
    %v453 = vsel %vm155, %v429, -inf
    %454 = vmax.xlane.f32.xlu0 %v453
    %v455 = vpop.xlane.xlu0 %454
    %v456 = vsub.f32 %v394, %v434
    %v457 = vsub.f32 %v399, %v437
    %v458 = vsub.f32 %v404, %v440
    %v459 = vsub.f32 %v409, %v443
    %v460 = vsub.f32 %v414, %v446
    %v461 = vsub.f32 %v419, %v449
    %v462 = vsub.f32 %v424, %v452
    %v463 = vsub.f32 %v429, %v455
    %v464 = vmul.f32 %v456, 1.442695
    %v465 = vpow.pop %v464
    %v466 = vmul.f32 %v457, 1.442695
    %v467 = vpow.pop %v466
    %v468 = vmul.f32 %v458, 1.442695
    %v469 = vpow.pop %v468
    %v470 = vmul.f32 %v459, 1.442695
    %v471 = vpow.pop %v470
    %v472 = vmul.f32 %v460, 1.442695
    %v473 = vpow.pop %v472
    %v474 = vmul.f32 %v461, 1.442695
    %v475 = vpow.pop %v474
    %v476 = vmul.f32 %v462, 1.442695
    %v477 = vpow.pop %v476
    %v478 = vmul.f32 %v463, 1.442695
    %v479 = vpow.pop %v478
    %v480 = vsel %vm155, %v465, 0.0
    %481 = vadd.xlane.f32.xlu0 %v480
    %v482 = vpop.xlane.xlu0 %481
    %v483 = vsel %vm155, %v467, 0.0
    %484 = vadd.xlane.f32.xlu0 %v483
    %v485 = vpop.xlane.xlu0 %484
    %v486 = vsel %vm155, %v469, 0.0
    %487 = vadd.xlane.f32.xlu0 %v486
    %v488 = vpop.xlane.xlu0 %487
    %v489 = vsel %vm155, %v471, 0.0
    %490 = vadd.xlane.f32.xlu0 %v489
    %v491 = vpop.xlane.xlu0 %490
    %v492 = vsel %vm155, %v473, 0.0
    %493 = vadd.xlane.f32.xlu0 %v492
    %v494 = vpop.xlane.xlu0 %493
    %v495 = vsel %vm155, %v475, 0.0
    %496 = vadd.xlane.f32.xlu0 %v495
    %v497 = vpop.xlane.xlu0 %496
    %v498 = vsel %vm155, %v477, 0.0
    %499 = vadd.xlane.f32.xlu0 %v498
    %v500 = vpop.xlane.xlu0 %499
    %v501 = vsel %vm155, %v479, 0.0
    %502 = vadd.xlane.f32.xlu0 %v501
    %v503 = vpop.xlane.xlu0 %502
    %v504 = vrcp.pop %v482
    %v505 = vrcp.pop %v485
    %v506 = vrcp.pop %v488
    %v507 = vrcp.pop %v491
    %v508 = vrcp.pop %v494
    %v509 = vrcp.pop %v497
    %v510 = vrcp.pop %v500
    %v511 = vrcp.pop %v503
    %v512 = vmul.f32 %v465, %v504
    %v513 = vmul.f32 %v467, %v505
    %v514 = vmul.f32 %v469, %v506
    %v515 = vmul.f32 %v471, %v507
    %v516 = vmul.f32 %v473, %v508
    %v517 = vmul.f32 %v475, %v509
    %v518 = vmul.f32 %v477, %v510
    %v519 = vmul.f32 %v479, %v511
    %520 = vrot.lane.b32.xlu0 %v147, 64
    %v521 = vpop.permute.xlu0 %520
    %522 = vrot.lane.b32.xlu0 %v152, 64
    %v523 = vpop.permute.xlu0 %522
    %v527 = vsel %vm155, %v512, 0
    %v530 = vsel %vm155, %v513, 0
    %v533 = vsel %vm155, %v514, 0
    %v536 = vsel %vm155, %v515, 0
    %v539 = vsel %vm155, %v516, 0
    %v542 = vsel %vm155, %v517, 0
    %v545 = vsel %vm155, %v518, 0
    %v548 = vsel %vm155, %v519, 0
    %550 = vmatprep.subr.mxu0 0.0
    %551 = vmatpush1.msra.mxu0 0.0
    %552 = vmatprep.subr.mxu0 0.0
    %553 = vmatpush1.msra.mxu0 0.0
    %554 = vmatprep.subr.mxu0 0.0
    %555 = vmatpush1.msra.mxu0 0.0
    %556 = vmatprep.subr.mxu0 0.0
    %557 = vmatpush1.msra.mxu0 0.0
    %558 = vmatprep.subr.mxu0 0.0
    %559 = vmatpush1.msra.mxu0 0.0
    %560 = vmatprep.subr.mxu0 0.0
    %561 = vmatpush1.msra.mxu0 0.0
    %562 = vmatprep.subr.mxu0 0.0
    %563 = vmatpush1.msra.mxu0 0.0
    %564 = vmatprep.subr.mxu0 0.0
    %565 = vmatpush1.msra.mxu0 0.0
    %566 = vmatprep.subr.mxu0 0.0
    %567 = vmatpush1.msra.mxu0 0.0
    %568 = vmatprep.subr.mxu0 0.0
    %569 = vmatpush1.msra.mxu0 0.0
    %570 = vmatprep.subr.mxu0 0.0
    %571 = vmatpush1.msra.mxu0 0.0
    %572 = vmatprep.subr.mxu0 0.0
    %573 = vmatpush1.msra.mxu0 0.0
    %574 = vmatprep.subr.mxu0 0.0
    %575 = vmatpush1.msra.mxu0 0.0
    %576 = vmatprep.subr.mxu0 0.0
    %577 = vmatpush1.msra.mxu0 0.0
    %578 = vmatprep.subr.mxu0 0.0
    %579 = vmatpush1.msra.mxu0 %v523
    %580 = vmatprep.subr.mxu0 0.0
    %581 = vmatpush1.msra.mxu0 %v521
    %582 = vmatprep.subr.mxu0 0.0
    %583 = vmatpush2.msra.mxu0 0.0
    %584 = vmatprep.subr.mxu0 0.0
    %585 = vmatpush2.msra.mxu0 0.0
    %586 = vmatprep.subr.mxu0 0.0
    %587 = vmatpush2.msra.mxu0 0.0
    %588 = vmatprep.subr.mxu0 0.0
    %589 = vmatpush2.msra.mxu0 0.0
    %590 = vmatprep.subr.mxu0 0.0
    %591 = vmatpush2.msra.mxu0 0.0
    %592 = vmatprep.subr.mxu0 0.0
    %593 = vmatpush2.msra.mxu0 0.0
    %594 = vmatprep.subr.mxu0 0.0
    %595 = vmatpush2.msra.mxu0 0.0
    %596 = vmatprep.subr.mxu0 0.0
    %597 = vmatpush2.msra.mxu0 0.0
    %598 = vmatprep.subr.mxu0 0.0
    %599 = vmatpush2.msra.mxu0 0.0
    %600 = vmatprep.subr.mxu0 0.0
    %601 = vmatpush2.msra.mxu0 0.0
    %602 = vmatprep.subr.mxu0 0.0
    %603 = vmatpush2.msra.mxu0 0.0
    %604 = vmatprep.subr.mxu0 0.0
    %605 = vmatpush2.msra.mxu0 0.0
    %606 = vmatprep.subr.mxu0 0.0
    %607 = vmatpush2.msra.mxu0 0.0
    %608 = vmatprep.subr.mxu0 0.0
    %609 = vmatpush2.msra.mxu0 0.0
    %610 = vmatprep.subr.mxu0 0.0
    %611 = vmatpush2.msra.mxu0 0.0
    %612 = vmatprep.subr.mxu0 0.0
    %613 = vmatpush2.msra.mxu0 0.0
    %614 = vmatprep.mubr.f32.mxu0 0.0
    %615 = vmatmul.mubr.f32.gmra.mxu0 %v527
    %v616 = vpop.f32.mrf.mxu0
    %v617 = vadd.f32 0.0, %v616
    %v618 = vpop.f32.mrf.mxu0
    %619 = vmatprep.mubr.f32.mxu0 0.0
    %620 = vmatmul.mubr.f32.gmra.mxu0 %v530
    %v621 = vpop.f32.mrf.mxu0
    %v622 = vadd.f32 0.0, %v621
    %v623 = vpop.f32.mrf.mxu0
    %624 = vmatprep.mubr.f32.mxu0 0.0
    %625 = vmatmul.mubr.f32.gmra.mxu0 %v533
    %v626 = vpop.f32.mrf.mxu0
    %v627 = vadd.f32 0.0, %v626
    %v628 = vpop.f32.mrf.mxu0
    %629 = vmatprep.mubr.f32.mxu0 0.0
    %630 = vmatmul.mubr.f32.gmra.mxu0 %v536
    %v631 = vpop.f32.mrf.mxu0
    %v632 = vadd.f32 0.0, %v631
    %v633 = vpop.f32.mrf.mxu0
    %634 = vmatprep.mubr.f32.mxu0 0.0
    %635 = vmatmul.mubr.f32.gmra.mxu0 %v539
    %v636 = vpop.f32.mrf.mxu0
    %v637 = vadd.f32 0.0, %v636
    %v638 = vpop.f32.mrf.mxu0
    %639 = vmatprep.mubr.f32.mxu0 0.0
    %640 = vmatmul.mubr.f32.gmra.mxu0 %v542
    %v641 = vpop.f32.mrf.mxu0
    %v642 = vadd.f32 0.0, %v641
    %v643 = vpop.f32.mrf.mxu0
    %644 = vmatprep.mubr.f32.mxu0 0.0
    %645 = vmatmul.mubr.f32.gmra.mxu0 %v545
    %v646 = vpop.f32.mrf.mxu0
    %v647 = vadd.f32 0.0, %v646
    %v648 = vpop.f32.mrf.mxu0
    %649 = vmatprep.mubr.f32.mxu0 0.0
    %650 = vmatmul.mubr.f32.gmra.mxu0 %v548
    %v651 = vpop.f32.mrf.mxu0
    %v652 = vadd.f32 0.0, %v651
    %v653 = vpop.f32.mrf.mxu0
    %654 = vdwg.mxu0
    %v655 = vmul.f32 %v617, %v36
    %v656 = vmul.f32 %v622, %v37
    %v657 = vmul.f32 %v627, %v38
    %v658 = vmul.f32 %v632, %v39
    %v659 = vmul.f32 %v637, %v40
    %v660 = vmul.f32 %v642, %v41
    %v661 = vmul.f32 %v647, %v42
    %v662 = vmul.f32 %v652, %v43
    %vm663 = vcmask 523264
    %v665 = vsel %vm663, %v60, 0
    %v668 = vsel %vm663, %v61, 0
    %670 = vmatprep.subr.mxu0 0.0
    %671 = vmatpush1.msra.mxu0 0.0
    %672 = vmatprep.subr.mxu0 0.0
    %673 = vmatpush1.msra.mxu0 0.0
    %674 = vmatprep.subr.mxu0 0.0
    %675 = vmatpush1.msra.mxu0 0.0
    %676 = vmatprep.subr.mxu0 0.0
    %677 = vmatpush1.msra.mxu0 0.0
    %678 = vmatprep.subr.mxu0 0.0
    %679 = vmatpush1.msra.mxu0 0.0
    %680 = vmatprep.subr.mxu0 0.0
    %681 = vmatpush1.msra.mxu0 0.0
    %682 = vmatprep.subr.mxu0 0.0
    %683 = vmatpush1.msra.mxu0 0.0
    %684 = vmatprep.subr.mxu0 0.0
    %685 = vmatpush1.msra.mxu0 0.0
    %686 = vmatprep.subr.mxu0 0.0
    %687 = vmatpush1.msra.mxu0 %v662
    %688 = vmatprep.subr.mxu0 0.0
    %689 = vmatpush1.msra.mxu0 %v661
    %690 = vmatprep.subr.mxu0 0.0
    %691 = vmatpush1.msra.mxu0 %v660
    %692 = vmatprep.subr.mxu0 0.0
    %693 = vmatpush1.msra.mxu0 %v659
    %694 = vmatprep.subr.mxu0 0.0
    %695 = vmatpush1.msra.mxu0 %v658
    %696 = vmatprep.subr.mxu0 0.0
    %697 = vmatpush1.msra.mxu0 %v657
    %698 = vmatprep.subr.mxu0 0.0
    %699 = vmatpush1.msra.mxu0 %v656
    %700 = vmatprep.subr.mxu0 0.0
    %701 = vmatpush1.msra.mxu0 %v655
    %702 = vmatprep.subr.mxu0 0.0
    %703 = vmatpush2.msra.mxu0 0.0
    %704 = vmatprep.subr.mxu0 0.0
    %705 = vmatpush2.msra.mxu0 0.0
    %706 = vmatprep.subr.mxu0 0.0
    %707 = vmatpush2.msra.mxu0 0.0
    %708 = vmatprep.subr.mxu0 0.0
    %709 = vmatpush2.msra.mxu0 0.0
    %710 = vmatprep.subr.mxu0 0.0
    %711 = vmatpush2.msra.mxu0 0.0
    %712 = vmatprep.subr.mxu0 0.0
    %713 = vmatpush2.msra.mxu0 0.0
    %714 = vmatprep.subr.mxu0 0.0
    %715 = vmatpush2.msra.mxu0 0.0
    %716 = vmatprep.subr.mxu0 0.0
    %717 = vmatpush2.msra.mxu0 0.0
    %718 = vmatprep.subr.mxu0 0.0
    %719 = vmatpush2.msra.mxu0 0.0
    %720 = vmatprep.subr.mxu0 0.0
    %721 = vmatpush2.msra.mxu0 0.0
    %722 = vmatprep.subr.mxu0 0.0
    %723 = vmatpush2.msra.mxu0 0.0
    %724 = vmatprep.subr.mxu0 0.0
    %725 = vmatpush2.msra.mxu0 0.0
    %726 = vmatprep.subr.mxu0 0.0
    %727 = vmatpush2.msra.mxu0 0.0
    %728 = vmatprep.subr.mxu0 0.0
    %729 = vmatpush2.msra.mxu0 0.0
    %730 = vmatprep.subr.mxu0 0.0
    %731 = vmatpush2.msra.mxu0 0.0
    %732 = vmatprep.subr.mxu0 0.0
    %733 = vmatpush2.msra.mxu0 0.0
    %734 = vmatprep.mubr.f32.mxu0 0.0
    %735 = vmatmul.mubr.f32.gmra.mxu0 %v665
    %v736 = vpop.f32.mrf.mxu0
    %v737 = vadd.f32 0.0, %v736
    %v738 = vpop.f32.mrf.mxu0
    %739 = vmatprep.mubr.f32.mxu0 0.0
    %740 = vmatmul.mubr.f32.gmra.mxu0 %v668
    %v741 = vpop.f32.mrf.mxu0
    %v742 = vadd.f32 0.0, %v741
    %v743 = vpop.f32.mrf.mxu0
    %744 = vdwg.mxu0
    %v745 = vld [vmem:[%s6] sm:$0xff]
    %v746 = vld [vmem:[%s6 + $0x8] sm:$0xff]
    %v747 = vld [vmem:[%s6 + $0x10] sm:$0xff]
    %v748 = vld [vmem:[%s6 + $0x18] sm:$0xff]
    %v749 = vlaneseq
    %v750 = vshrl.u32 %v749, 7
    %v751 = vsub.s32 1, %v750
    %v752 = vrot.slane %v64, %v751
    %v754 = vsel %vm73, %v737, 0
    %v757 = vsel %vm73, %v742, 0
    %759 = vmatprep.subr.mxu0 0.0
    %760 = vmatpush1.msra.mxu0 0.0
    %761 = vmatprep.subr.mxu0 0.0
    %762 = vmatpush1.msra.mxu0 0.0
    %763 = vmatprep.subr.mxu0 0.0
    %764 = vmatpush1.msra.mxu0 0.0
    %765 = vmatprep.subr.mxu0 0.0
    %766 = vmatpush1.msra.mxu0 0.0
    %767 = vmatprep.subr.mxu0 0.0
    %768 = vmatpush1.msra.mxu0 0.0
    %769 = vmatprep.subr.mxu0 0.0
    %770 = vmatpush1.msra.mxu0 0.0
    %771 = vmatprep.subr.mxu0 0.0
    %772 = vmatpush1.msra.mxu0 0.0
    %773 = vmatprep.subr.mxu0 0.0
    %774 = vmatpush1.msra.mxu0 0.0
    %775 = vmatprep.subr.mxu0 0.0
    %776 = vmatpush1.msra.mxu0 0.0
    %777 = vmatprep.subr.mxu0 0.0
    %778 = vmatpush1.msra.mxu0 0.0
    %779 = vmatprep.subr.mxu0 0.0
    %780 = vmatpush1.msra.mxu0 0.0
    %781 = vmatprep.subr.mxu0 0.0
    %782 = vmatpush1.msra.mxu0 0.0
    %783 = vmatprep.subr.mxu0 0.0
    %784 = vmatpush1.msra.mxu0 %v748
    %785 = vmatprep.subr.mxu0 0.0
    %786 = vmatpush1.msra.mxu0 %v747
    %787 = vmatprep.subr.mxu0 0.0
    %788 = vmatpush1.msra.mxu0 %v746
    %789 = vmatprep.subr.mxu0 0.0
    %790 = vmatpush1.msra.mxu0 %v745
    %791 = vmatprep.subr.mxu0 0.0
    %792 = vmatpush2.msra.mxu0 0.0
    %793 = vmatprep.subr.mxu0 0.0
    %794 = vmatpush2.msra.mxu0 0.0
    %795 = vmatprep.subr.mxu0 0.0
    %796 = vmatpush2.msra.mxu0 0.0
    %797 = vmatprep.subr.mxu0 0.0
    %798 = vmatpush2.msra.mxu0 0.0
    %799 = vmatprep.subr.mxu0 0.0
    %800 = vmatpush2.msra.mxu0 0.0
    %801 = vmatprep.subr.mxu0 0.0
    %802 = vmatpush2.msra.mxu0 0.0
    %803 = vmatprep.subr.mxu0 0.0
    %804 = vmatpush2.msra.mxu0 0.0
    %805 = vmatprep.subr.mxu0 0.0
    %806 = vmatpush2.msra.mxu0 0.0
    %807 = vmatprep.subr.mxu0 0.0
    %808 = vmatpush2.msra.mxu0 0.0
    %809 = vmatprep.subr.mxu0 0.0
    %810 = vmatpush2.msra.mxu0 0.0
    %811 = vmatprep.subr.mxu0 0.0
    %812 = vmatpush2.msra.mxu0 0.0
    %813 = vmatprep.subr.mxu0 0.0
    %814 = vmatpush2.msra.mxu0 0.0
    %815 = vmatprep.subr.mxu0 0.0
    %816 = vmatpush2.msra.mxu0 0.0
    %817 = vmatprep.subr.mxu0 0.0
    %818 = vmatpush2.msra.mxu0 0.0
    %819 = vmatprep.subr.mxu0 0.0
    %820 = vmatpush2.msra.mxu0 0.0
    %821 = vmatprep.subr.mxu0 0.0
    %822 = vmatpush2.msra.mxu0 0.0
    %823 = vmatprep.mubr.f32.mxu0 0.0
    %824 = vmatmul.mubr.f32.gmra.mxu0 %v754
    %v825 = vpop.f32.mrf.mxu0
    %v826 = vadd.f32 %v752, %v825
    %v827 = vpop.f32.mrf.mxu0
    %828 = vmatprep.mubr.f32.mxu0 0.0
    %829 = vmatmul.mubr.f32.gmra.mxu0 %v757
    %v830 = vpop.f32.mrf.mxu0
    %v831 = vadd.f32 %v752, %v830
    %v832 = vpop.f32.mrf.mxu0
    %833 = vdwg.mxu0
    %v834 = vadd.f32 %v826, %v62
    %v835 = vadd.f32 %v831, %v63
    %v836 = vsel %vm73, %v834, 0.0
    %837 = vadd.xlane.f32.xlu0 %v836
    %v838 = vpop.xlane.xlu0 %837
    %v839 = vsel %vm73, %v835, 0.0
    %840 = vadd.xlane.f32.xlu0 %v839
    %v841 = vpop.xlane.xlu0 %840
    %v842 = vrcp.pop 32.0
    %v843 = vmul.f32 %v838, %v842
    %v844 = vmul.f32 %v841, %v842
    %v845 = vsub.f32 %v834, %v843
    %v846 = vsub.f32 %v835, %v844
    %v847 = vmul.f32 %v845, %v845
    %v848 = vmul.f32 %v846, %v846
    %v849 = vsel %vm73, %v847, 0.0
    %850 = vadd.xlane.f32.xlu0 %v849
    %v851 = vpop.xlane.xlu0 %850
    %v852 = vsel %vm73, %v848, 0.0
    %853 = vadd.xlane.f32.xlu0 %v852
    %v854 = vpop.xlane.xlu0 %853
    %v855 = vmul.f32 %v851, %v842
    %v856 = vmul.f32 %v854, %v842
    %v857 = vadd.f32 %v855, 1e-12
    %v858 = vadd.f32 %v856, 1e-12
    %v859 = vrsqrt.pop %v857
    %v860 = vrsqrt.pop %v858
    %v861 = vmul.f32 %v845, %v859
    %v862 = vmul.f32 %v846, %v860
    %v863 = vlaneseq
    %v864 = vshrl.u32 %v863, 7
    %v865 = vsub.s32 2, %v864
    %v866 = vrot.slane %v64, %v865
    %v867 = vmul.f32 %v866, %v861
    %v868 = vmul.f32 %v866, %v862
    %v869 = vlaneseq
    %v870 = vshrl.u32 %v869, 7
    %v871 = vsub.s32 3, %v870
    %v872 = vrot.slane %v64, %v871
    %v873 = vadd.f32 %v867, %v872
    %v874 = vadd.f32 %v868, %v872
    %v875 = vld [vmem:[%s7] sm:$0xff]
    %v876 = vld [vmem:[%s7 + $0x8] sm:$0xff]
    %v877 = vld [vmem:[%s7 + $0x10] sm:$0xff]
    %v878 = vld [vmem:[%s7 + $0x18] sm:$0xff]
    %v879 = vlaneseq
    %v880 = vshrl.u32 %v879, 7
    %v881 = vsub.s32 4, %v880
    %v882 = vrot.slane %v64, %v881
    %v884 = vsel %vm73, %v873, 0
    %v887 = vsel %vm73, %v874, 0
    %889 = vmatprep.subr.mxu0 0.0
    %890 = vmatpush1.msra.mxu0 0.0
    %891 = vmatprep.subr.mxu0 0.0
    %892 = vmatpush1.msra.mxu0 0.0
    %893 = vmatprep.subr.mxu0 0.0
    %894 = vmatpush1.msra.mxu0 0.0
    %895 = vmatprep.subr.mxu0 0.0
    %896 = vmatpush1.msra.mxu0 0.0
    %897 = vmatprep.subr.mxu0 0.0
    %898 = vmatpush1.msra.mxu0 0.0
    %899 = vmatprep.subr.mxu0 0.0
    %900 = vmatpush1.msra.mxu0 0.0
    %901 = vmatprep.subr.mxu0 0.0
    %902 = vmatpush1.msra.mxu0 0.0
    %903 = vmatprep.subr.mxu0 0.0
    %904 = vmatpush1.msra.mxu0 0.0
    %905 = vmatprep.subr.mxu0 0.0
    %906 = vmatpush1.msra.mxu0 0.0
    %907 = vmatprep.subr.mxu0 0.0
    %908 = vmatpush1.msra.mxu0 0.0
    %909 = vmatprep.subr.mxu0 0.0
    %910 = vmatpush1.msra.mxu0 0.0
    %911 = vmatprep.subr.mxu0 0.0
    %912 = vmatpush1.msra.mxu0 0.0
    %913 = vmatprep.subr.mxu0 0.0
    %914 = vmatpush1.msra.mxu0 %v878
    %915 = vmatprep.subr.mxu0 0.0
    %916 = vmatpush1.msra.mxu0 %v877
    %917 = vmatprep.subr.mxu0 0.0
    %918 = vmatpush1.msra.mxu0 %v876
    %919 = vmatprep.subr.mxu0 0.0
    %920 = vmatpush1.msra.mxu0 %v875
    %921 = vmatprep.subr.mxu0 0.0
    %922 = vmatpush2.msra.mxu0 0.0
    %923 = vmatprep.subr.mxu0 0.0
    %924 = vmatpush2.msra.mxu0 0.0
    %925 = vmatprep.subr.mxu0 0.0
    %926 = vmatpush2.msra.mxu0 0.0
    %927 = vmatprep.subr.mxu0 0.0
    %928 = vmatpush2.msra.mxu0 0.0
    %929 = vmatprep.subr.mxu0 0.0
    %930 = vmatpush2.msra.mxu0 0.0
    %931 = vmatprep.subr.mxu0 0.0
    %932 = vmatpush2.msra.mxu0 0.0
    %933 = vmatprep.subr.mxu0 0.0
    %934 = vmatpush2.msra.mxu0 0.0
    %935 = vmatprep.subr.mxu0 0.0
    %936 = vmatpush2.msra.mxu0 0.0
    %937 = vmatprep.subr.mxu0 0.0
    %938 = vmatpush2.msra.mxu0 0.0
    %939 = vmatprep.subr.mxu0 0.0
    %940 = vmatpush2.msra.mxu0 0.0
    %941 = vmatprep.subr.mxu0 0.0
    %942 = vmatpush2.msra.mxu0 0.0
    %943 = vmatprep.subr.mxu0 0.0
    %944 = vmatpush2.msra.mxu0 0.0
    %945 = vmatprep.subr.mxu0 0.0
    %946 = vmatpush2.msra.mxu0 0.0
    %947 = vmatprep.subr.mxu0 0.0
    %948 = vmatpush2.msra.mxu0 0.0
    %949 = vmatprep.subr.mxu0 0.0
    %950 = vmatpush2.msra.mxu0 0.0
    %951 = vmatprep.subr.mxu0 0.0
    %952 = vmatpush2.msra.mxu0 0.0
    %953 = vmatprep.mubr.f32.mxu0 0.0
    %954 = vmatmul.mubr.f32.gmra.mxu0 %v884
    %v955 = vpop.f32.mrf.mxu0
    %v956 = vadd.f32 %v882, %v955
    %v957 = vpop.f32.mrf.mxu0
    %958 = vmatprep.mubr.f32.mxu0 0.0
    %959 = vmatmul.mubr.f32.gmra.mxu0 %v887
    %v960 = vpop.f32.mrf.mxu0
    %v961 = vadd.f32 %v882, %v960
    %v962 = vpop.f32.mrf.mxu0
    %963 = vdwg.mxu0
    %v964 = vmul.f32 %v956, 0.5
    %v965 = vmul.f32 %v961, 0.5
    %v966 = vrcp.pop 1.4142135
    %v967 = vmul.f32 %v956, %v966
    %v968 = vmul.f32 %v961, %v966
    %v969 = verf.f32.pop %v967
    %v970 = verf.f32.pop %v968
    %v971 = vadd.f32 %v969, 1.0
    %v972 = vadd.f32 %v970, 1.0
    %v973 = vmul.f32 %v964, %v971
    %v974 = vmul.f32 %v965, %v972
    %v975 = vld [vmem:[%s8] sm:$0xff]
    %v976 = vld [vmem:[%s8 + $0x8] sm:$0xff]
    %v977 = vld [vmem:[%s8 + $0x10] sm:$0xff]
    %v978 = vld [vmem:[%s8 + $0x18] sm:$0xff]
    %v979 = vld [vmem:[%s8 + $0x20] sm:$0xff]
    %v980 = vld [vmem:[%s8 + $0x28] sm:$0xff]
    %v981 = vld [vmem:[%s8 + $0x30] sm:$0xff]
    %v982 = vld [vmem:[%s8 + $0x38] sm:$0xff]
    %v983 = vlaneseq
    %v984 = vshrl.u32 %v983, 7
    %v985 = vsub.s32 5, %v984
    %v986 = vrot.slane %v64, %v985
    %v988 = vsel %vm663, %v973, 0
    %v991 = vsel %vm663, %v974, 0
    %993 = vmatprep.subr.mxu0 0.0
    %994 = vmatpush1.msra.mxu0 0.0
    %995 = vmatprep.subr.mxu0 0.0
    %996 = vmatpush1.msra.mxu0 0.0
    %997 = vmatprep.subr.mxu0 0.0
    %998 = vmatpush1.msra.mxu0 0.0
    %999 = vmatprep.subr.mxu0 0.0
    %1000 = vmatpush1.msra.mxu0 0.0
    %1001 = vmatprep.subr.mxu0 0.0
    %1002 = vmatpush1.msra.mxu0 0.0
    %1003 = vmatprep.subr.mxu0 0.0
    %1004 = vmatpush1.msra.mxu0 0.0
    %1005 = vmatprep.subr.mxu0 0.0
    %1006 = vmatpush1.msra.mxu0 0.0
    %1007 = vmatprep.subr.mxu0 0.0
    %1008 = vmatpush1.msra.mxu0 0.0
    %1009 = vmatprep.subr.mxu0 0.0
    %1010 = vmatpush1.msra.mxu0 %v982
    %1011 = vmatprep.subr.mxu0 0.0
    %1012 = vmatpush1.msra.mxu0 %v981
    %1013 = vmatprep.subr.mxu0 0.0
    %1014 = vmatpush1.msra.mxu0 %v980
    %1015 = vmatprep.subr.mxu0 0.0
    %1016 = vmatpush1.msra.mxu0 %v979
    %1017 = vmatprep.subr.mxu0 0.0
    %1018 = vmatpush1.msra.mxu0 %v978
    %1019 = vmatprep.subr.mxu0 0.0
    %1020 = vmatpush1.msra.mxu0 %v977
    %1021 = vmatprep.subr.mxu0 0.0
    %1022 = vmatpush1.msra.mxu0 %v976
    %1023 = vmatprep.subr.mxu0 0.0
    %1024 = vmatpush1.msra.mxu0 %v975
    %1025 = vmatprep.subr.mxu0 0.0
    %1026 = vmatpush2.msra.mxu0 0.0
    %1027 = vmatprep.subr.mxu0 0.0
    %1028 = vmatpush2.msra.mxu0 0.0
    %1029 = vmatprep.subr.mxu0 0.0
    %1030 = vmatpush2.msra.mxu0 0.0
    %1031 = vmatprep.subr.mxu0 0.0
    %1032 = vmatpush2.msra.mxu0 0.0
    %1033 = vmatprep.subr.mxu0 0.0
    %1034 = vmatpush2.msra.mxu0 0.0
    %1035 = vmatprep.subr.mxu0 0.0
    %1036 = vmatpush2.msra.mxu0 0.0
    %1037 = vmatprep.subr.mxu0 0.0
    %1038 = vmatpush2.msra.mxu0 0.0
    %1039 = vmatprep.subr.mxu0 0.0
    %1040 = vmatpush2.msra.mxu0 0.0
    %1041 = vmatprep.subr.mxu0 0.0
    %1042 = vmatpush2.msra.mxu0 0.0
    %1043 = vmatprep.subr.mxu0 0.0
    %1044 = vmatpush2.msra.mxu0 0.0
    %1045 = vmatprep.subr.mxu0 0.0
    %1046 = vmatpush2.msra.mxu0 0.0
    %1047 = vmatprep.subr.mxu0 0.0
    %1048 = vmatpush2.msra.mxu0 0.0
    %1049 = vmatprep.subr.mxu0 0.0
    %1050 = vmatpush2.msra.mxu0 0.0
    %1051 = vmatprep.subr.mxu0 0.0
    %1052 = vmatpush2.msra.mxu0 0.0
    %1053 = vmatprep.subr.mxu0 0.0
    %1054 = vmatpush2.msra.mxu0 0.0
    %1055 = vmatprep.subr.mxu0 0.0
    %1056 = vmatpush2.msra.mxu0 0.0
    %1057 = vmatprep.mubr.f32.mxu0 0.0
    %1058 = vmatmul.mubr.f32.gmra.mxu0 %v988
    %v1059 = vpop.f32.mrf.mxu0
    %v1060 = vadd.f32 %v986, %v1059
    %v1061 = vpop.f32.mrf.mxu0
    %1062 = vmatprep.mubr.f32.mxu0 0.0
    %1063 = vmatmul.mubr.f32.gmra.mxu0 %v991
    %v1064 = vpop.f32.mrf.mxu0
    %v1065 = vadd.f32 %v986, %v1064
    %v1066 = vpop.f32.mrf.mxu0
    %1067 = vdwg.mxu0
    %v1068 = vadd.f32 %v1060, %v873
    %v1069 = vadd.f32 %v1065, %v874
    %v1070 = vsel %vm73, %v1068, 0.0
    %1071 = vadd.xlane.f32.xlu0 %v1070
    %v1072 = vpop.xlane.xlu0 %1071
    %v1073 = vsel %vm73, %v1069, 0.0
    %1074 = vadd.xlane.f32.xlu0 %v1073
    %v1075 = vpop.xlane.xlu0 %1074
    %v1076 = vmul.f32 %v1072, %v842
    %v1077 = vmul.f32 %v1075, %v842
    %v1078 = vsub.f32 %v1068, %v1076
    %v1079 = vsub.f32 %v1069, %v1077
    %v1080 = vmul.f32 %v1078, %v1078
    %v1081 = vmul.f32 %v1079, %v1079
    %v1082 = vsel %vm73, %v1080, 0.0
    %1083 = vadd.xlane.f32.xlu0 %v1082
    %v1084 = vpop.xlane.xlu0 %1083
    %v1085 = vsel %vm73, %v1081, 0.0
    %1086 = vadd.xlane.f32.xlu0 %v1085
    %v1087 = vpop.xlane.xlu0 %1086
    %v1088 = vmul.f32 %v1084, %v842
    %v1089 = vmul.f32 %v1087, %v842
    %v1090 = vadd.f32 %v1088, 1e-12
    %v1091 = vadd.f32 %v1089, 1e-12
    %v1092 = vrsqrt.pop %v1090
    %v1093 = vrsqrt.pop %v1091
    %v1094 = vmul.f32 %v1078, %v1092
    %v1095 = vmul.f32 %v1079, %v1093
    %v1096 = vlaneseq
    %v1097 = vshrl.u32 %v1096, 7
    %v1098 = vsub.s32 6, %v1097
    %v1099 = vrot.slane %v64, %v1098
    %v1100 = vmul.f32 %v1099, %v1094
    %v1101 = vmul.f32 %v1099, %v1095
    %v1102 = vlaneseq
    %v1103 = vshrl.u32 %v1102, 7
    %v1104 = vsub.s32 7, %v1103
    %v1105 = vrot.slane %v64, %v1104
    %v1106 = vadd.f32 %v1100, %v1105
    %v1107 = vadd.f32 %v1101, %v1105
    %1108 = vst.msk [vmem:[#allocation2] sm:$0xff] %vm73, %v1106
    %1109 = vst.msk [vmem:[#allocation2 + $0x8] sm:$0xff] %vm73, %v1107
    %s1110 = scalar_lea.vmem %s9, 8
    %v1111 = vld [vmem:[%s1110] sm:$0xff]
    %s1112 = scalar_lea.vmem %s5, 32
    %v1113 = vld [vmem:[%s1112] sm:$0xff]
    %v1114 = vld [vmem:[%s1112 + $0x8] sm:$0xff]
    %v1115 = vld [vmem:[%s1112 + $0x10] sm:$0xff]
    %v1116 = vld [vmem:[%s1112 + $0x18] sm:$0xff]
    %v1117 = vlaneseq
    %v1118 = vshrl.u32 %v1117, 7
    %v1119 = vsub.s32 0, %v1118
    %v1120 = vrot.slane %v1111, %v1119
    %v1122 = vsel %vm73, %v1106, 0
    %v1125 = vsel %vm73, %v1107, 0
    %1127 = vmatprep.subr.mxu0 0.0
    %1128 = vmatpush1.msra.mxu0 0.0
    %1129 = vmatprep.subr.mxu0 0.0
    %1130 = vmatpush1.msra.mxu0 0.0
    %1131 = vmatprep.subr.mxu0 0.0
    %1132 = vmatpush1.msra.mxu0 0.0
    %1133 = vmatprep.subr.mxu0 0.0
    %1134 = vmatpush1.msra.mxu0 0.0
    %1135 = vmatprep.subr.mxu0 0.0
    %1136 = vmatpush1.msra.mxu0 0.0
    %1137 = vmatprep.subr.mxu0 0.0
    %1138 = vmatpush1.msra.mxu0 0.0
    %1139 = vmatprep.subr.mxu0 0.0
    %1140 = vmatpush1.msra.mxu0 0.0
    %1141 = vmatprep.subr.mxu0 0.0
    %1142 = vmatpush1.msra.mxu0 0.0
    %1143 = vmatprep.subr.mxu0 0.0
    %1144 = vmatpush1.msra.mxu0 0.0
    %1145 = vmatprep.subr.mxu0 0.0
    %1146 = vmatpush1.msra.mxu0 0.0
    %1147 = vmatprep.subr.mxu0 0.0
    %1148 = vmatpush1.msra.mxu0 0.0
    %1149 = vmatprep.subr.mxu0 0.0
    %1150 = vmatpush1.msra.mxu0 0.0
    %1151 = vmatprep.subr.mxu0 0.0
    %1152 = vmatpush1.msra.mxu0 %v1116
    %1153 = vmatprep.subr.mxu0 0.0
    %1154 = vmatpush1.msra.mxu0 %v1115
    %1155 = vmatprep.subr.mxu0 0.0
    %1156 = vmatpush1.msra.mxu0 %v1114
    %1157 = vmatprep.subr.mxu0 0.0
    %1158 = vmatpush1.msra.mxu0 %v1113
    %1159 = vmatprep.subr.mxu0 0.0
    %1160 = vmatpush2.msra.mxu0 0.0
    %1161 = vmatprep.subr.mxu0 0.0
    %1162 = vmatpush2.msra.mxu0 0.0
    %1163 = vmatprep.subr.mxu0 0.0
    %1164 = vmatpush2.msra.mxu0 0.0
    %1165 = vmatprep.subr.mxu0 0.0
    %1166 = vmatpush2.msra.mxu0 0.0
    %1167 = vmatprep.subr.mxu0 0.0
    %1168 = vmatpush2.msra.mxu0 0.0
    %1169 = vmatprep.subr.mxu0 0.0
    %1170 = vmatpush2.msra.mxu0 0.0
    %1171 = vmatprep.subr.mxu0 0.0
    %1172 = vmatpush2.msra.mxu0 0.0
    %1173 = vmatprep.subr.mxu0 0.0
    %1174 = vmatpush2.msra.mxu0 0.0
    %1175 = vmatprep.subr.mxu0 0.0
    %1176 = vmatpush2.msra.mxu0 0.0
    %1177 = vmatprep.subr.mxu0 0.0
    %1178 = vmatpush2.msra.mxu0 0.0
    %1179 = vmatprep.subr.mxu0 0.0
    %1180 = vmatpush2.msra.mxu0 0.0
    %1181 = vmatprep.subr.mxu0 0.0
    %1182 = vmatpush2.msra.mxu0 0.0
    %1183 = vmatprep.subr.mxu0 0.0
    %1184 = vmatpush2.msra.mxu0 0.0
    %1185 = vmatprep.subr.mxu0 0.0
    %1186 = vmatpush2.msra.mxu0 0.0
    %1187 = vmatprep.subr.mxu0 0.0
    %1188 = vmatpush2.msra.mxu0 0.0
    %1189 = vmatprep.subr.mxu0 0.0
    %1190 = vmatpush2.msra.mxu0 0.0
    %1191 = vmatprep.mubr.f32.mxu0 0.0
    %1192 = vmatmul.mubr.f32.gmra.mxu0 %v1122
    %v1193 = vpop.f32.mrf.mxu0
    %v1194 = vadd.f32 %v1120, %v1193
    %v1195 = vpop.f32.mrf.mxu0
    %1196 = vmatprep.mubr.f32.mxu0 0.0
    %1197 = vmatmul.mubr.f32.gmra.mxu0 %v1125
    %v1198 = vpop.f32.mrf.mxu0
    %v1199 = vadd.f32 %v1120, %v1198
    %v1200 = vpop.f32.mrf.mxu0
    %1201 = vdwg.mxu0
    %1202 = vmatprep.subr.mxu0 0.0
    %1203 = vmatpush1.msra.mxu0 0.0
    %1204 = vmatprep.subr.mxu0 0.0
    %1205 = vmatpush1.msra.mxu0 0.0
    %1206 = vmatprep.subr.mxu0 0.0
    %1207 = vmatpush1.msra.mxu0 0.0
    %1208 = vmatprep.subr.mxu0 0.0
    %1209 = vmatpush1.msra.mxu0 0.0
    %1210 = vmatprep.subr.mxu0 0.0
    %1211 = vmatpush1.msra.mxu0 0.0
    %1212 = vmatprep.subr.mxu0 0.0
    %1213 = vmatpush1.msra.mxu0 0.0
    %1214 = vmatprep.subr.mxu0 0.0
    %1215 = vmatpush1.msra.mxu0 0.0
    %1216 = vmatprep.subr.mxu0 0.0
    %1217 = vmatpush1.msra.mxu0 0.0
    %1218 = vmatprep.subr.mxu0 0.0
    %1219 = vmatpush1.msra.mxu0 0.0
    %1220 = vmatprep.subr.mxu0 0.0
    %1221 = vmatpush1.msra.mxu0 0.0
    %1222 = vmatprep.subr.mxu0 0.0
    %1223 = vmatpush1.msra.mxu0 0.0
    %1224 = vmatprep.subr.mxu0 0.0
    %1225 = vmatpush1.msra.mxu0 0.0
    %1226 = vmatprep.subr.mxu0 0.0
    %1227 = vmatpush1.msra.mxu0 0.0
    %1228 = vmatprep.subr.mxu0 0.0
    %1229 = vmatpush1.msra.mxu0 0.0
    %1230 = vmatprep.subr.mxu0 0.0
    %1231 = vmatpush1.msra.mxu0 %v1199
    %1232 = vmatprep.subr.mxu0 0.0
    %1233 = vmatpush1.msra.mxu0 %v1194
    %1234 = vmatprep.subr.mxu0 0.0
    %1235 = vmatpush2.msra.mxu0 0.0
    %1236 = vmatprep.subr.mxu0 0.0
    %1237 = vmatpush2.msra.mxu0 0.0
    %1238 = vmatprep.subr.mxu0 0.0
    %1239 = vmatpush2.msra.mxu0 0.0
    %1240 = vmatprep.subr.mxu0 0.0
    %1241 = vmatpush2.msra.mxu0 0.0
    %1242 = vmatprep.subr.mxu0 0.0
    %1243 = vmatpush2.msra.mxu0 0.0
    %1244 = vmatprep.subr.mxu0 0.0
    %1245 = vmatpush2.msra.mxu0 0.0
    %1246 = vmatprep.subr.mxu0 0.0
    %1247 = vmatpush2.msra.mxu0 0.0
    %1248 = vmatprep.subr.mxu0 0.0
    %1249 = vmatpush2.msra.mxu0 0.0
    %1250 = vmatprep.subr.mxu0 0.0
    %1251 = vmatpush2.msra.mxu0 0.0
    %1252 = vmatprep.subr.mxu0 0.0
    %1253 = vmatpush2.msra.mxu0 0.0
    %1254 = vmatprep.subr.mxu0 0.0
    %1255 = vmatpush2.msra.mxu0 0.0
    %1256 = vmatprep.subr.mxu0 0.0
    %1257 = vmatpush2.msra.mxu0 0.0
    %1258 = vmatprep.subr.mxu0 0.0
    %1259 = vmatpush2.msra.mxu0 0.0
    %1260 = vmatprep.subr.mxu0 0.0
    %1261 = vmatpush2.msra.mxu0 0.0
    %1262 = vmatprep.subr.mxu0 0.0
    %1263 = vmatpush2.msra.mxu0 0.0
    %1264 = vmatprep.subr.mxu0 0.0
    %1265 = vmatpush2.msra.mxu0 0.0
    %1266 = vmatprep.mubr.f32.mxu0 0.0
    %1267 = vmatmul.mubr.f32.gmra.mxu0 %v157
    %v1268 = vpop.f32.mrf.mxu0
    %v1269 = vadd.f32 0.0, %v1268
    %v1270 = vpop.f32.mrf.mxu0
    %1271 = vmatprep.mubr.f32.mxu0 0.0
    %1272 = vmatmul.mubr.f32.gmra.mxu0 %v160
    %v1273 = vpop.f32.mrf.mxu0
    %v1274 = vadd.f32 0.0, %v1273
    %v1275 = vpop.f32.mrf.mxu0
    %1276 = vmatprep.mubr.f32.mxu0 0.0
    %1277 = vmatmul.mubr.f32.gmra.mxu0 %v163
    %v1278 = vpop.f32.mrf.mxu0
    %v1279 = vadd.f32 0.0, %v1278
    %v1280 = vpop.f32.mrf.mxu0
    %1281 = vmatprep.mubr.f32.mxu0 0.0
    %1282 = vmatmul.mubr.f32.gmra.mxu0 %v166
    %v1283 = vpop.f32.mrf.mxu0
    %v1284 = vadd.f32 0.0, %v1283
    %v1285 = vpop.f32.mrf.mxu0
    %1286 = vmatprep.mubr.f32.mxu0 0.0
    %1287 = vmatmul.mubr.f32.gmra.mxu0 %v169
    %v1288 = vpop.f32.mrf.mxu0
    %v1289 = vadd.f32 0.0, %v1288
    %v1290 = vpop.f32.mrf.mxu0
    %1291 = vmatprep.mubr.f32.mxu0 0.0
    %1292 = vmatmul.mubr.f32.gmra.mxu0 %v172
    %v1293 = vpop.f32.mrf.mxu0
    %v1294 = vadd.f32 0.0, %v1293
    %v1295 = vpop.f32.mrf.mxu0
    %1296 = vmatprep.mubr.f32.mxu0 0.0
    %1297 = vmatmul.mubr.f32.gmra.mxu0 %v175
    %v1298 = vpop.f32.mrf.mxu0
    %v1299 = vadd.f32 0.0, %v1298
    %v1300 = vpop.f32.mrf.mxu0
    %1301 = vmatprep.mubr.f32.mxu0 0.0
    %1302 = vmatmul.mubr.f32.gmra.mxu0 %v178
    %v1303 = vpop.f32.mrf.mxu0
    %v1304 = vadd.f32 0.0, %v1303
    %v1305 = vpop.f32.mrf.mxu0
    %1306 = vdwg.mxu0
    %v1307 = vmul.f32 %v1269, %v36
    %v1308 = vmul.f32 %v1274, %v37
    %v1309 = vmul.f32 %v1279, %v38
    %v1310 = vmul.f32 %v1284, %v39
    %v1311 = vmul.f32 %v1289, %v40
    %v1312 = vmul.f32 %v1294, %v41
    %v1313 = vmul.f32 %v1299, %v42
    %v1314 = vmul.f32 %v1304, %v43
    %1317 = vrot.lane.b32.xlu0 %v1194, 96
    %v1318 = vpop.permute.xlu0 %1317
    %1319 = vrot.lane.b32.xlu0 %v1199, 96
    %v1320 = vpop.permute.xlu0 %1319
    %v1322 = vsel %vm73, %v1307, 0
    %v1325 = vsel %vm73, %v1308, 0
    %v1328 = vsel %vm73, %v1309, 0
    %v1331 = vsel %vm73, %v1310, 0
    %v1334 = vsel %vm73, %v1311, 0
    %v1337 = vsel %vm73, %v1312, 0
    %v1340 = vsel %vm73, %v1313, 0
    %v1343 = vsel %vm73, %v1314, 0
    %v1345 = vsel %vm73, %v1318, 0
    %v1347 = vsel %vm73, %v1320, 0
    %1349 = vmatprep.subr.mxu0 0.0
    %1350 = vmatpush1.xpose.msra.mxu0 0.0
    %1351 = vmatprep.subr.mxu0 0.0
    %1352 = vmatpush1.xpose.msra.mxu0 0.0
    %1353 = vmatprep.subr.mxu0 0.0
    %1354 = vmatpush1.xpose.msra.mxu0 0.0
    %1355 = vmatprep.subr.mxu0 0.0
    %1356 = vmatpush1.xpose.msra.mxu0 0.0
    %1357 = vmatprep.subr.mxu0 0.0
    %1358 = vmatpush1.xpose.msra.mxu0 0.0
    %1359 = vmatprep.subr.mxu0 0.0
    %1360 = vmatpush1.xpose.msra.mxu0 0.0
    %1361 = vmatprep.subr.mxu0 0.0
    %1362 = vmatpush1.xpose.msra.mxu0 0.0
    %1363 = vmatprep.subr.mxu0 0.0
    %1364 = vmatpush1.xpose.msra.mxu0 0.0
    %1365 = vmatprep.subr.mxu0 0.0
    %1366 = vmatpush1.xpose.msra.mxu0 0.0
    %1367 = vmatprep.subr.mxu0 0.0
    %1368 = vmatpush1.xpose.msra.mxu0 0.0
    %1369 = vmatprep.subr.mxu0 0.0
    %1370 = vmatpush1.xpose.msra.mxu0 0.0
    %1371 = vmatprep.subr.mxu0 0.0
    %1372 = vmatpush1.xpose.msra.mxu0 0.0
    %1373 = vmatprep.subr.mxu0 0.0
    %1374 = vmatpush1.xpose.msra.mxu0 0.0
    %1375 = vmatprep.subr.mxu0 0.0
    %1376 = vmatpush1.xpose.msra.mxu0 0.0
    %1377 = vmatprep.subr.mxu0 0.0
    %1378 = vmatpush1.xpose.msra.mxu0 %v1347
    %1379 = vmatprep.subr.mxu0 0.0
    %1380 = vmatpush1.xpose.msra.mxu0 %v1345
    %1381 = vmatprep.subr.mxu0 0.0
    %1382 = vmatpush2.xpose.msra.mxu0 0.0
    %1383 = vmatprep.subr.mxu0 0.0
    %1384 = vmatpush2.xpose.msra.mxu0 0.0
    %1385 = vmatprep.subr.mxu0 0.0
    %1386 = vmatpush2.xpose.msra.mxu0 0.0
    %1387 = vmatprep.subr.mxu0 0.0
    %1388 = vmatpush2.xpose.msra.mxu0 0.0
    %1389 = vmatprep.subr.mxu0 0.0
    %1390 = vmatpush2.xpose.msra.mxu0 0.0
    %1391 = vmatprep.subr.mxu0 0.0
    %1392 = vmatpush2.xpose.msra.mxu0 0.0
    %1393 = vmatprep.subr.mxu0 0.0
    %1394 = vmatpush2.xpose.msra.mxu0 0.0
    %1395 = vmatprep.subr.mxu0 0.0
    %1396 = vmatpush2.xpose.msra.mxu0 0.0
    %1397 = vmatprep.subr.mxu0 0.0
    %1398 = vmatpush2.xpose.msra.mxu0 0.0
    %1399 = vmatprep.subr.mxu0 0.0
    %1400 = vmatpush2.xpose.msra.mxu0 0.0
    %1401 = vmatprep.subr.mxu0 0.0
    %1402 = vmatpush2.xpose.msra.mxu0 0.0
    %1403 = vmatprep.subr.mxu0 0.0
    %1404 = vmatpush2.xpose.msra.mxu0 0.0
    %1405 = vmatprep.subr.mxu0 0.0
    %1406 = vmatpush2.xpose.msra.mxu0 0.0
    %1407 = vmatprep.subr.mxu0 0.0
    %1408 = vmatpush2.xpose.msra.mxu0 0.0
    %1409 = vmatprep.subr.mxu0 0.0
    %1410 = vmatpush2.xpose.msra.mxu0 0.0
    %1411 = vmatprep.subr.mxu0 0.0
    %1412 = vmatpush2.xpose.msra.mxu0 0.0
    %1413 = vmatprep.mubr.f32.mxu0 0.0
    %1414 = vmatmul.mubr.f32.gmra.mxu0 %v1322
    %v1415 = vpop.f32.mrf.mxu0
    %v1416 = vadd.f32 %v44, %v1415
    %v1417 = vpop.f32.mrf.mxu0
    %1418 = vmatprep.mubr.f32.mxu0 0.0
    %1419 = vmatmul.mubr.f32.gmra.mxu0 %v1325
    %v1420 = vpop.f32.mrf.mxu0
    %v1421 = vadd.f32 %v45, %v1420
    %v1422 = vpop.f32.mrf.mxu0
    %1423 = vmatprep.mubr.f32.mxu0 0.0
    %1424 = vmatmul.mubr.f32.gmra.mxu0 %v1328
    %v1425 = vpop.f32.mrf.mxu0
    %v1426 = vadd.f32 %v46, %v1425
    %v1427 = vpop.f32.mrf.mxu0
    %1428 = vmatprep.mubr.f32.mxu0 0.0
    %1429 = vmatmul.mubr.f32.gmra.mxu0 %v1331
    %v1430 = vpop.f32.mrf.mxu0
    %v1431 = vadd.f32 %v47, %v1430
    %v1432 = vpop.f32.mrf.mxu0
    %1433 = vmatprep.mubr.f32.mxu0 0.0
    %1434 = vmatmul.mubr.f32.gmra.mxu0 %v1334
    %v1435 = vpop.f32.mrf.mxu0
    %v1436 = vadd.f32 %v48, %v1435
    %v1437 = vpop.f32.mrf.mxu0
    %1438 = vmatprep.mubr.f32.mxu0 0.0
    %1439 = vmatmul.mubr.f32.gmra.mxu0 %v1337
    %v1440 = vpop.f32.mrf.mxu0
    %v1441 = vadd.f32 %v49, %v1440
    %v1442 = vpop.f32.mrf.mxu0
    %1443 = vmatprep.mubr.f32.mxu0 0.0
    %1444 = vmatmul.mubr.f32.gmra.mxu0 %v1340
    %v1445 = vpop.f32.mrf.mxu0
    %v1446 = vadd.f32 %v50, %v1445
    %v1447 = vpop.f32.mrf.mxu0
    %1448 = vmatprep.mubr.f32.mxu0 0.0
    %1449 = vmatmul.mubr.f32.gmra.mxu0 %v1343
    %v1450 = vpop.f32.mrf.mxu0
    %v1451 = vadd.f32 %v51, %v1450
    %v1452 = vpop.f32.mrf.mxu0
    %1453 = vdwg.mxu0
    %v1454 = vsel %vm155, %v1416, -inf
    %1455 = vmax.xlane.f32.xlu0 %v1454
    %v1456 = vpop.xlane.xlu0 %1455
    %v1457 = vsel %vm155, %v1421, -inf
    %1458 = vmax.xlane.f32.xlu0 %v1457
    %v1459 = vpop.xlane.xlu0 %1458
    %v1460 = vsel %vm155, %v1426, -inf
    %1461 = vmax.xlane.f32.xlu0 %v1460
    %v1462 = vpop.xlane.xlu0 %1461
    %v1463 = vsel %vm155, %v1431, -inf
    %1464 = vmax.xlane.f32.xlu0 %v1463
    %v1465 = vpop.xlane.xlu0 %1464
    %v1466 = vsel %vm155, %v1436, -inf
    %1467 = vmax.xlane.f32.xlu0 %v1466
    %v1468 = vpop.xlane.xlu0 %1467
    %v1469 = vsel %vm155, %v1441, -inf
    %1470 = vmax.xlane.f32.xlu0 %v1469
    %v1471 = vpop.xlane.xlu0 %1470
    %v1472 = vsel %vm155, %v1446, -inf
    %1473 = vmax.xlane.f32.xlu0 %v1472
    %v1474 = vpop.xlane.xlu0 %1473
    %v1475 = vsel %vm155, %v1451, -inf
    %1476 = vmax.xlane.f32.xlu0 %v1475
    %v1477 = vpop.xlane.xlu0 %1476
    %v1478 = vsub.f32 %v1416, %v1456
    %v1479 = vsub.f32 %v1421, %v1459
    %v1480 = vsub.f32 %v1426, %v1462
    %v1481 = vsub.f32 %v1431, %v1465
    %v1482 = vsub.f32 %v1436, %v1468
    %v1483 = vsub.f32 %v1441, %v1471
    %v1484 = vsub.f32 %v1446, %v1474
    %v1485 = vsub.f32 %v1451, %v1477
    %v1486 = vmul.f32 %v1478, 1.442695
    %v1487 = vpow.pop %v1486
    %v1488 = vmul.f32 %v1479, 1.442695
    %v1489 = vpow.pop %v1488
    %v1490 = vmul.f32 %v1480, 1.442695
    %v1491 = vpow.pop %v1490
    %v1492 = vmul.f32 %v1481, 1.442695
    %v1493 = vpow.pop %v1492
    %v1494 = vmul.f32 %v1482, 1.442695
    %v1495 = vpow.pop %v1494
    %v1496 = vmul.f32 %v1483, 1.442695
    %v1497 = vpow.pop %v1496
    %v1498 = vmul.f32 %v1484, 1.442695
    %v1499 = vpow.pop %v1498
    %v1500 = vmul.f32 %v1485, 1.442695
    %v1501 = vpow.pop %v1500
    %v1502 = vsel %vm155, %v1487, 0.0
    %1503 = vadd.xlane.f32.xlu0 %v1502
    %v1504 = vpop.xlane.xlu0 %1503
    %v1505 = vsel %vm155, %v1489, 0.0
    %1506 = vadd.xlane.f32.xlu0 %v1505
    %v1507 = vpop.xlane.xlu0 %1506
    %v1508 = vsel %vm155, %v1491, 0.0
    %1509 = vadd.xlane.f32.xlu0 %v1508
    %v1510 = vpop.xlane.xlu0 %1509
    %v1511 = vsel %vm155, %v1493, 0.0
    %1512 = vadd.xlane.f32.xlu0 %v1511
    %v1513 = vpop.xlane.xlu0 %1512
    %v1514 = vsel %vm155, %v1495, 0.0
    %1515 = vadd.xlane.f32.xlu0 %v1514
    %v1516 = vpop.xlane.xlu0 %1515
    %v1517 = vsel %vm155, %v1497, 0.0
    %1518 = vadd.xlane.f32.xlu0 %v1517
    %v1519 = vpop.xlane.xlu0 %1518
    %v1520 = vsel %vm155, %v1499, 0.0
    %1521 = vadd.xlane.f32.xlu0 %v1520
    %v1522 = vpop.xlane.xlu0 %1521
    %v1523 = vsel %vm155, %v1501, 0.0
    %1524 = vadd.xlane.f32.xlu0 %v1523
    %v1525 = vpop.xlane.xlu0 %1524
    %v1526 = vrcp.pop %v1504
    %v1527 = vrcp.pop %v1507
    %v1528 = vrcp.pop %v1510
    %v1529 = vrcp.pop %v1513
    %v1530 = vrcp.pop %v1516
    %v1531 = vrcp.pop %v1519
    %v1532 = vrcp.pop %v1522
    %v1533 = vrcp.pop %v1525
    %v1534 = vmul.f32 %v1487, %v1526
    %v1535 = vmul.f32 %v1489, %v1527
    %v1536 = vmul.f32 %v1491, %v1528
    %v1537 = vmul.f32 %v1493, %v1529
    %v1538 = vmul.f32 %v1495, %v1530
    %v1539 = vmul.f32 %v1497, %v1531
    %v1540 = vmul.f32 %v1499, %v1532
    %v1541 = vmul.f32 %v1501, %v1533
    %1542 = vrot.lane.b32.xlu0 %v1194, 64
    %v1543 = vpop.permute.xlu0 %1542
    %1544 = vrot.lane.b32.xlu0 %v1199, 64
    %v1545 = vpop.permute.xlu0 %1544
    %v1549 = vsel %vm155, %v1534, 0
    %v1552 = vsel %vm155, %v1535, 0
    %v1555 = vsel %vm155, %v1536, 0
    %v1558 = vsel %vm155, %v1537, 0
    %v1561 = vsel %vm155, %v1538, 0
    %v1564 = vsel %vm155, %v1539, 0
    %v1567 = vsel %vm155, %v1540, 0
    %v1570 = vsel %vm155, %v1541, 0
    %1572 = vmatprep.subr.mxu0 0.0
    %1573 = vmatpush1.msra.mxu0 0.0
    %1574 = vmatprep.subr.mxu0 0.0
    %1575 = vmatpush1.msra.mxu0 0.0
    %1576 = vmatprep.subr.mxu0 0.0
    %1577 = vmatpush1.msra.mxu0 0.0
    %1578 = vmatprep.subr.mxu0 0.0
    %1579 = vmatpush1.msra.mxu0 0.0
    %1580 = vmatprep.subr.mxu0 0.0
    %1581 = vmatpush1.msra.mxu0 0.0
    %1582 = vmatprep.subr.mxu0 0.0
    %1583 = vmatpush1.msra.mxu0 0.0
    %1584 = vmatprep.subr.mxu0 0.0
    %1585 = vmatpush1.msra.mxu0 0.0
    %1586 = vmatprep.subr.mxu0 0.0
    %1587 = vmatpush1.msra.mxu0 0.0
    %1588 = vmatprep.subr.mxu0 0.0
    %1589 = vmatpush1.msra.mxu0 0.0
    %1590 = vmatprep.subr.mxu0 0.0
    %1591 = vmatpush1.msra.mxu0 0.0
    %1592 = vmatprep.subr.mxu0 0.0
    %1593 = vmatpush1.msra.mxu0 0.0
    %1594 = vmatprep.subr.mxu0 0.0
    %1595 = vmatpush1.msra.mxu0 0.0
    %1596 = vmatprep.subr.mxu0 0.0
    %1597 = vmatpush1.msra.mxu0 0.0
    %1598 = vmatprep.subr.mxu0 0.0
    %1599 = vmatpush1.msra.mxu0 0.0
    %1600 = vmatprep.subr.mxu0 0.0
    %1601 = vmatpush1.msra.mxu0 %v1545
    %1602 = vmatprep.subr.mxu0 0.0
    %1603 = vmatpush1.msra.mxu0 %v1543
    %1604 = vmatprep.subr.mxu0 0.0
    %1605 = vmatpush2.msra.mxu0 0.0
    %1606 = vmatprep.subr.mxu0 0.0
    %1607 = vmatpush2.msra.mxu0 0.0
    %1608 = vmatprep.subr.mxu0 0.0
    %1609 = vmatpush2.msra.mxu0 0.0
    %1610 = vmatprep.subr.mxu0 0.0
    %1611 = vmatpush2.msra.mxu0 0.0
    %1612 = vmatprep.subr.mxu0 0.0
    %1613 = vmatpush2.msra.mxu0 0.0
    %1614 = vmatprep.subr.mxu0 0.0
    %1615 = vmatpush2.msra.mxu0 0.0
    %1616 = vmatprep.subr.mxu0 0.0
    %1617 = vmatpush2.msra.mxu0 0.0
    %1618 = vmatprep.subr.mxu0 0.0
    %1619 = vmatpush2.msra.mxu0 0.0
    %1620 = vmatprep.subr.mxu0 0.0
    %1621 = vmatpush2.msra.mxu0 0.0
    %1622 = vmatprep.subr.mxu0 0.0
    %1623 = vmatpush2.msra.mxu0 0.0
    %1624 = vmatprep.subr.mxu0 0.0
    %1625 = vmatpush2.msra.mxu0 0.0
    %1626 = vmatprep.subr.mxu0 0.0
    %1627 = vmatpush2.msra.mxu0 0.0
    %1628 = vmatprep.subr.mxu0 0.0
    %1629 = vmatpush2.msra.mxu0 0.0
    %1630 = vmatprep.subr.mxu0 0.0
    %1631 = vmatpush2.msra.mxu0 0.0
    %1632 = vmatprep.subr.mxu0 0.0
    %1633 = vmatpush2.msra.mxu0 0.0
    %1634 = vmatprep.subr.mxu0 0.0
    %1635 = vmatpush2.msra.mxu0 0.0
    %1636 = vmatprep.mubr.f32.mxu0 0.0
    %1637 = vmatmul.mubr.f32.gmra.mxu0 %v1549
    %v1638 = vpop.f32.mrf.mxu0
    %v1639 = vadd.f32 0.0, %v1638
    %v1640 = vpop.f32.mrf.mxu0
    %1641 = vmatprep.mubr.f32.mxu0 0.0
    %1642 = vmatmul.mubr.f32.gmra.mxu0 %v1552
    %v1643 = vpop.f32.mrf.mxu0
    %v1644 = vadd.f32 0.0, %v1643
    %v1645 = vpop.f32.mrf.mxu0
    %1646 = vmatprep.mubr.f32.mxu0 0.0
    %1647 = vmatmul.mubr.f32.gmra.mxu0 %v1555
    %v1648 = vpop.f32.mrf.mxu0
    %v1649 = vadd.f32 0.0, %v1648
    %v1650 = vpop.f32.mrf.mxu0
    %1651 = vmatprep.mubr.f32.mxu0 0.0
    %1652 = vmatmul.mubr.f32.gmra.mxu0 %v1558
    %v1653 = vpop.f32.mrf.mxu0
    %v1654 = vadd.f32 0.0, %v1653
    %v1655 = vpop.f32.mrf.mxu0
    %1656 = vmatprep.mubr.f32.mxu0 0.0
    %1657 = vmatmul.mubr.f32.gmra.mxu0 %v1561
    %v1658 = vpop.f32.mrf.mxu0
    %v1659 = vadd.f32 0.0, %v1658
    %v1660 = vpop.f32.mrf.mxu0
    %1661 = vmatprep.mubr.f32.mxu0 0.0
    %1662 = vmatmul.mubr.f32.gmra.mxu0 %v1564
    %v1663 = vpop.f32.mrf.mxu0
    %v1664 = vadd.f32 0.0, %v1663
    %v1665 = vpop.f32.mrf.mxu0
    %1666 = vmatprep.mubr.f32.mxu0 0.0
    %1667 = vmatmul.mubr.f32.gmra.mxu0 %v1567
    %v1668 = vpop.f32.mrf.mxu0
    %v1669 = vadd.f32 0.0, %v1668
    %v1670 = vpop.f32.mrf.mxu0
    %1671 = vmatprep.mubr.f32.mxu0 0.0
    %1672 = vmatmul.mubr.f32.gmra.mxu0 %v1570
    %v1673 = vpop.f32.mrf.mxu0
    %v1674 = vadd.f32 0.0, %v1673
    %v1675 = vpop.f32.mrf.mxu0
    %1676 = vdwg.mxu0
    %v1677 = vmul.f32 %v1639, %v36
    %v1678 = vmul.f32 %v1644, %v37
    %v1679 = vmul.f32 %v1649, %v38
    %v1680 = vmul.f32 %v1654, %v39
    %v1681 = vmul.f32 %v1659, %v40
    %v1682 = vmul.f32 %v1664, %v41
    %v1683 = vmul.f32 %v1669, %v42
    %v1684 = vmul.f32 %v1674, %v43
    %1685 = vmatprep.subr.mxu0 0.0
    %1686 = vmatpush1.msra.mxu0 0.0
    %1687 = vmatprep.subr.mxu0 0.0
    %1688 = vmatpush1.msra.mxu0 0.0
    %1689 = vmatprep.subr.mxu0 0.0
    %1690 = vmatpush1.msra.mxu0 0.0
    %1691 = vmatprep.subr.mxu0 0.0
    %1692 = vmatpush1.msra.mxu0 0.0
    %1693 = vmatprep.subr.mxu0 0.0
    %1694 = vmatpush1.msra.mxu0 0.0
    %1695 = vmatprep.subr.mxu0 0.0
    %1696 = vmatpush1.msra.mxu0 0.0
    %1697 = vmatprep.subr.mxu0 0.0
    %1698 = vmatpush1.msra.mxu0 0.0
    %1699 = vmatprep.subr.mxu0 0.0
    %1700 = vmatpush1.msra.mxu0 0.0
    %1701 = vmatprep.subr.mxu0 0.0
    %1702 = vmatpush1.msra.mxu0 %v1684
    %1703 = vmatprep.subr.mxu0 0.0
    %1704 = vmatpush1.msra.mxu0 %v1683
    %1705 = vmatprep.subr.mxu0 0.0
    %1706 = vmatpush1.msra.mxu0 %v1682
    %1707 = vmatprep.subr.mxu0 0.0
    %1708 = vmatpush1.msra.mxu0 %v1681
    %1709 = vmatprep.subr.mxu0 0.0
    %1710 = vmatpush1.msra.mxu0 %v1680
    %1711 = vmatprep.subr.mxu0 0.0
    %1712 = vmatpush1.msra.mxu0 %v1679
    %1713 = vmatprep.subr.mxu0 0.0
    %1714 = vmatpush1.msra.mxu0 %v1678
    %1715 = vmatprep.subr.mxu0 0.0
    %1716 = vmatpush1.msra.mxu0 %v1677
    %1717 = vmatprep.subr.mxu0 0.0
    %1718 = vmatpush2.msra.mxu0 0.0
    %1719 = vmatprep.subr.mxu0 0.0
    %1720 = vmatpush2.msra.mxu0 0.0
    %1721 = vmatprep.subr.mxu0 0.0
    %1722 = vmatpush2.msra.mxu0 0.0
    %1723 = vmatprep.subr.mxu0 0.0
    %1724 = vmatpush2.msra.mxu0 0.0
    %1725 = vmatprep.subr.mxu0 0.0
    %1726 = vmatpush2.msra.mxu0 0.0
    %1727 = vmatprep.subr.mxu0 0.0
    %1728 = vmatpush2.msra.mxu0 0.0
    %1729 = vmatprep.subr.mxu0 0.0
    %1730 = vmatpush2.msra.mxu0 0.0
    %1731 = vmatprep.subr.mxu0 0.0
    %1732 = vmatpush2.msra.mxu0 0.0
    %1733 = vmatprep.subr.mxu0 0.0
    %1734 = vmatpush2.msra.mxu0 0.0
    %1735 = vmatprep.subr.mxu0 0.0
    %1736 = vmatpush2.msra.mxu0 0.0
    %1737 = vmatprep.subr.mxu0 0.0
    %1738 = vmatpush2.msra.mxu0 0.0
    %1739 = vmatprep.subr.mxu0 0.0
    %1740 = vmatpush2.msra.mxu0 0.0
    %1741 = vmatprep.subr.mxu0 0.0
    %1742 = vmatpush2.msra.mxu0 0.0
    %1743 = vmatprep.subr.mxu0 0.0
    %1744 = vmatpush2.msra.mxu0 0.0
    %1745 = vmatprep.subr.mxu0 0.0
    %1746 = vmatpush2.msra.mxu0 0.0
    %1747 = vmatprep.subr.mxu0 0.0
    %1748 = vmatpush2.msra.mxu0 0.0
    %1749 = vmatprep.mubr.f32.mxu0 0.0
    %1750 = vmatmul.mubr.f32.gmra.mxu0 %v665
    %v1751 = vpop.f32.mrf.mxu0
    %v1752 = vadd.f32 0.0, %v1751
    %v1753 = vpop.f32.mrf.mxu0
    %1754 = vmatprep.mubr.f32.mxu0 0.0
    %1755 = vmatmul.mubr.f32.gmra.mxu0 %v668
    %v1756 = vpop.f32.mrf.mxu0
    %v1757 = vadd.f32 0.0, %v1756
    %v1758 = vpop.f32.mrf.mxu0
    %1759 = vdwg.mxu0
    %s1760 = scalar_lea.vmem %s6, 32
    %v1761 = vld [vmem:[%s1760] sm:$0xff]
    %v1762 = vld [vmem:[%s1760 + $0x8] sm:$0xff]
    %v1763 = vld [vmem:[%s1760 + $0x10] sm:$0xff]
    %v1764 = vld [vmem:[%s1760 + $0x18] sm:$0xff]
    %v1765 = vlaneseq
    %v1766 = vshrl.u32 %v1765, 7
    %v1767 = vsub.s32 1, %v1766
    %v1768 = vrot.slane %v1111, %v1767
    %v1770 = vsel %vm73, %v1752, 0
    %v1773 = vsel %vm73, %v1757, 0
    %1775 = vmatprep.subr.mxu0 0.0
    %1776 = vmatpush1.msra.mxu0 0.0
    %1777 = vmatprep.subr.mxu0 0.0
    %1778 = vmatpush1.msra.mxu0 0.0
    %1779 = vmatprep.subr.mxu0 0.0
    %1780 = vmatpush1.msra.mxu0 0.0
    %1781 = vmatprep.subr.mxu0 0.0
    %1782 = vmatpush1.msra.mxu0 0.0
    %1783 = vmatprep.subr.mxu0 0.0
    %1784 = vmatpush1.msra.mxu0 0.0
    %1785 = vmatprep.subr.mxu0 0.0
    %1786 = vmatpush1.msra.mxu0 0.0
    %1787 = vmatprep.subr.mxu0 0.0
    %1788 = vmatpush1.msra.mxu0 0.0
    %1789 = vmatprep.subr.mxu0 0.0
    %1790 = vmatpush1.msra.mxu0 0.0
    %1791 = vmatprep.subr.mxu0 0.0
    %1792 = vmatpush1.msra.mxu0 0.0
    %1793 = vmatprep.subr.mxu0 0.0
    %1794 = vmatpush1.msra.mxu0 0.0
    %1795 = vmatprep.subr.mxu0 0.0
    %1796 = vmatpush1.msra.mxu0 0.0
    %1797 = vmatprep.subr.mxu0 0.0
    %1798 = vmatpush1.msra.mxu0 0.0
    %1799 = vmatprep.subr.mxu0 0.0
    %1800 = vmatpush1.msra.mxu0 %v1764
    %1801 = vmatprep.subr.mxu0 0.0
    %1802 = vmatpush1.msra.mxu0 %v1763
    %1803 = vmatprep.subr.mxu0 0.0
    %1804 = vmatpush1.msra.mxu0 %v1762
    %1805 = vmatprep.subr.mxu0 0.0
    %1806 = vmatpush1.msra.mxu0 %v1761
    %1807 = vmatprep.subr.mxu0 0.0
    %1808 = vmatpush2.msra.mxu0 0.0
    %1809 = vmatprep.subr.mxu0 0.0
    %1810 = vmatpush2.msra.mxu0 0.0
    %1811 = vmatprep.subr.mxu0 0.0
    %1812 = vmatpush2.msra.mxu0 0.0
    %1813 = vmatprep.subr.mxu0 0.0
    %1814 = vmatpush2.msra.mxu0 0.0
    %1815 = vmatprep.subr.mxu0 0.0
    %1816 = vmatpush2.msra.mxu0 0.0
    %1817 = vmatprep.subr.mxu0 0.0
    %1818 = vmatpush2.msra.mxu0 0.0
    %1819 = vmatprep.subr.mxu0 0.0
    %1820 = vmatpush2.msra.mxu0 0.0
    %1821 = vmatprep.subr.mxu0 0.0
    %1822 = vmatpush2.msra.mxu0 0.0
    %1823 = vmatprep.subr.mxu0 0.0
    %1824 = vmatpush2.msra.mxu0 0.0
    %1825 = vmatprep.subr.mxu0 0.0
    %1826 = vmatpush2.msra.mxu0 0.0
    %1827 = vmatprep.subr.mxu0 0.0
    %1828 = vmatpush2.msra.mxu0 0.0
    %1829 = vmatprep.subr.mxu0 0.0
    %1830 = vmatpush2.msra.mxu0 0.0
    %1831 = vmatprep.subr.mxu0 0.0
    %1832 = vmatpush2.msra.mxu0 0.0
    %1833 = vmatprep.subr.mxu0 0.0
    %1834 = vmatpush2.msra.mxu0 0.0
    %1835 = vmatprep.subr.mxu0 0.0
    %1836 = vmatpush2.msra.mxu0 0.0
    %1837 = vmatprep.subr.mxu0 0.0
    %1838 = vmatpush2.msra.mxu0 0.0
    %1839 = vmatprep.mubr.f32.mxu0 0.0
    %1840 = vmatmul.mubr.f32.gmra.mxu0 %v1770
    %v1841 = vpop.f32.mrf.mxu0
    %v1842 = vadd.f32 %v1768, %v1841
    %v1843 = vpop.f32.mrf.mxu0
    %1844 = vmatprep.mubr.f32.mxu0 0.0
    %1845 = vmatmul.mubr.f32.gmra.mxu0 %v1773
    %v1846 = vpop.f32.mrf.mxu0
    %v1847 = vadd.f32 %v1768, %v1846
    %v1848 = vpop.f32.mrf.mxu0
    %1849 = vdwg.mxu0
    %v1850 = vadd.f32 %v1842, %v1106
    %v1851 = vadd.f32 %v1847, %v1107
    %v1852 = vsel %vm73, %v1850, 0.0
    %1853 = vadd.xlane.f32.xlu0 %v1852
    %v1854 = vpop.xlane.xlu0 %1853
    %v1855 = vsel %vm73, %v1851, 0.0
    %1856 = vadd.xlane.f32.xlu0 %v1855
    %v1857 = vpop.xlane.xlu0 %1856
    %v1858 = vmul.f32 %v1854, %v842
    %v1859 = vmul.f32 %v1857, %v842
    %v1860 = vsub.f32 %v1850, %v1858
    %v1861 = vsub.f32 %v1851, %v1859
    %v1862 = vmul.f32 %v1860, %v1860
    %v1863 = vmul.f32 %v1861, %v1861
    %v1864 = vsel %vm73, %v1862, 0.0
    %1865 = vadd.xlane.f32.xlu0 %v1864
    %v1866 = vpop.xlane.xlu0 %1865
    %v1867 = vsel %vm73, %v1863, 0.0
    %1868 = vadd.xlane.f32.xlu0 %v1867
    %v1869 = vpop.xlane.xlu0 %1868
    %v1870 = vmul.f32 %v1866, %v842
    %v1871 = vmul.f32 %v1869, %v842
    %v1872 = vadd.f32 %v1870, 1e-12
    %v1873 = vadd.f32 %v1871, 1e-12
    %v1874 = vrsqrt.pop %v1872
    %v1875 = vrsqrt.pop %v1873
    %v1876 = vmul.f32 %v1860, %v1874
    %v1877 = vmul.f32 %v1861, %v1875
    %v1878 = vlaneseq
    %v1879 = vshrl.u32 %v1878, 7
    %v1880 = vsub.s32 2, %v1879
    %v1881 = vrot.slane %v1111, %v1880
    %v1882 = vmul.f32 %v1881, %v1876
    %v1883 = vmul.f32 %v1881, %v1877
    %v1884 = vlaneseq
    %v1885 = vshrl.u32 %v1884, 7
    %v1886 = vsub.s32 3, %v1885
    %v1887 = vrot.slane %v1111, %v1886
    %v1888 = vadd.f32 %v1882, %v1887
    %v1889 = vadd.f32 %v1883, %v1887
    %s1890 = scalar_lea.vmem %s7, 32
    %v1891 = vld [vmem:[%s1890] sm:$0xff]
    %v1892 = vld [vmem:[%s1890 + $0x8] sm:$0xff]
    %v1893 = vld [vmem:[%s1890 + $0x10] sm:$0xff]
    %v1894 = vld [vmem:[%s1890 + $0x18] sm:$0xff]
    %v1895 = vlaneseq
    %v1896 = vshrl.u32 %v1895, 7
    %v1897 = vsub.s32 4, %v1896
    %v1898 = vrot.slane %v1111, %v1897
    %v1900 = vsel %vm73, %v1888, 0
    %v1903 = vsel %vm73, %v1889, 0
    %1905 = vmatprep.subr.mxu0 0.0
    %1906 = vmatpush1.msra.mxu0 0.0
    %1907 = vmatprep.subr.mxu0 0.0
    %1908 = vmatpush1.msra.mxu0 0.0
    %1909 = vmatprep.subr.mxu0 0.0
    %1910 = vmatpush1.msra.mxu0 0.0
    %1911 = vmatprep.subr.mxu0 0.0
    %1912 = vmatpush1.msra.mxu0 0.0
    %1913 = vmatprep.subr.mxu0 0.0
    %1914 = vmatpush1.msra.mxu0 0.0
    %1915 = vmatprep.subr.mxu0 0.0
    %1916 = vmatpush1.msra.mxu0 0.0
    %1917 = vmatprep.subr.mxu0 0.0
    %1918 = vmatpush1.msra.mxu0 0.0
    %1919 = vmatprep.subr.mxu0 0.0
    %1920 = vmatpush1.msra.mxu0 0.0
    %1921 = vmatprep.subr.mxu0 0.0
    %1922 = vmatpush1.msra.mxu0 0.0
    %1923 = vmatprep.subr.mxu0 0.0
    %1924 = vmatpush1.msra.mxu0 0.0
    %1925 = vmatprep.subr.mxu0 0.0
    %1926 = vmatpush1.msra.mxu0 0.0
    %1927 = vmatprep.subr.mxu0 0.0
    %1928 = vmatpush1.msra.mxu0 0.0
    %1929 = vmatprep.subr.mxu0 0.0
    %1930 = vmatpush1.msra.mxu0 %v1894
    %1931 = vmatprep.subr.mxu0 0.0
    %1932 = vmatpush1.msra.mxu0 %v1893
    %1933 = vmatprep.subr.mxu0 0.0
    %1934 = vmatpush1.msra.mxu0 %v1892
    %1935 = vmatprep.subr.mxu0 0.0
    %1936 = vmatpush1.msra.mxu0 %v1891
    %1937 = vmatprep.subr.mxu0 0.0
    %1938 = vmatpush2.msra.mxu0 0.0
    %1939 = vmatprep.subr.mxu0 0.0
    %1940 = vmatpush2.msra.mxu0 0.0
    %1941 = vmatprep.subr.mxu0 0.0
    %1942 = vmatpush2.msra.mxu0 0.0
    %1943 = vmatprep.subr.mxu0 0.0
    %1944 = vmatpush2.msra.mxu0 0.0
    %1945 = vmatprep.subr.mxu0 0.0
    %1946 = vmatpush2.msra.mxu0 0.0
    %1947 = vmatprep.subr.mxu0 0.0
    %1948 = vmatpush2.msra.mxu0 0.0
    %1949 = vmatprep.subr.mxu0 0.0
    %1950 = vmatpush2.msra.mxu0 0.0
    %1951 = vmatprep.subr.mxu0 0.0
    %1952 = vmatpush2.msra.mxu0 0.0
    %1953 = vmatprep.subr.mxu0 0.0
    %1954 = vmatpush2.msra.mxu0 0.0
    %1955 = vmatprep.subr.mxu0 0.0
    %1956 = vmatpush2.msra.mxu0 0.0
    %1957 = vmatprep.subr.mxu0 0.0
    %1958 = vmatpush2.msra.mxu0 0.0
    %1959 = vmatprep.subr.mxu0 0.0
    %1960 = vmatpush2.msra.mxu0 0.0
    %1961 = vmatprep.subr.mxu0 0.0
    %1962 = vmatpush2.msra.mxu0 0.0
    %1963 = vmatprep.subr.mxu0 0.0
    %1964 = vmatpush2.msra.mxu0 0.0
    %1965 = vmatprep.subr.mxu0 0.0
    %1966 = vmatpush2.msra.mxu0 0.0
    %1967 = vmatprep.subr.mxu0 0.0
    %1968 = vmatpush2.msra.mxu0 0.0
    %1969 = vmatprep.mubr.f32.mxu0 0.0
    %1970 = vmatmul.mubr.f32.gmra.mxu0 %v1900
    %v1971 = vpop.f32.mrf.mxu0
    %v1972 = vadd.f32 %v1898, %v1971
    %v1973 = vpop.f32.mrf.mxu0
    %1974 = vmatprep.mubr.f32.mxu0 0.0
    %1975 = vmatmul.mubr.f32.gmra.mxu0 %v1903
    %v1976 = vpop.f32.mrf.mxu0
    %v1977 = vadd.f32 %v1898, %v1976
    %v1978 = vpop.f32.mrf.mxu0
    %1979 = vdwg.mxu0
    %v1980 = vmul.f32 %v1972, 0.5
    %v1981 = vmul.f32 %v1977, 0.5
    %v1982 = vmul.f32 %v1972, %v966
    %v1983 = vmul.f32 %v1977, %v966
    %v1984 = verf.f32.pop %v1982
    %v1985 = verf.f32.pop %v1983
    %v1986 = vadd.f32 %v1984, 1.0
    %v1987 = vadd.f32 %v1985, 1.0
    %v1988 = vmul.f32 %v1980, %v1986
    %v1989 = vmul.f32 %v1981, %v1987
    %s1990 = scalar_lea.vmem %s8, 64
    %v1991 = vld [vmem:[%s1990] sm:$0xff]
    %v1992 = vld [vmem:[%s1990 + $0x8] sm:$0xff]
    %v1993 = vld [vmem:[%s1990 + $0x10] sm:$0xff]
    %v1994 = vld [vmem:[%s1990 + $0x18] sm:$0xff]
    %v1995 = vld [vmem:[%s1990 + $0x20] sm:$0xff]
    %v1996 = vld [vmem:[%s1990 + $0x28] sm:$0xff]
    %v1997 = vld [vmem:[%s1990 + $0x30] sm:$0xff]
    %v1998 = vld [vmem:[%s1990 + $0x38] sm:$0xff]
    %v1999 = vlaneseq
    %v2000 = vshrl.u32 %v1999, 7
    %v2001 = vsub.s32 5, %v2000
    %v2002 = vrot.slane %v1111, %v2001
    %v2004 = vsel %vm663, %v1988, 0
    %v2007 = vsel %vm663, %v1989, 0
    %2009 = vmatprep.subr.mxu0 0.0
    %2010 = vmatpush1.msra.mxu0 0.0
    %2011 = vmatprep.subr.mxu0 0.0
    %2012 = vmatpush1.msra.mxu0 0.0
    %2013 = vmatprep.subr.mxu0 0.0
    %2014 = vmatpush1.msra.mxu0 0.0
    %2015 = vmatprep.subr.mxu0 0.0
    %2016 = vmatpush1.msra.mxu0 0.0
    %2017 = vmatprep.subr.mxu0 0.0
    %2018 = vmatpush1.msra.mxu0 0.0
    %2019 = vmatprep.subr.mxu0 0.0
    %2020 = vmatpush1.msra.mxu0 0.0
    %2021 = vmatprep.subr.mxu0 0.0
    %2022 = vmatpush1.msra.mxu0 0.0
    %2023 = vmatprep.subr.mxu0 0.0
    %2024 = vmatpush1.msra.mxu0 0.0
    %2025 = vmatprep.subr.mxu0 0.0
    %2026 = vmatpush1.msra.mxu0 %v1998
    %2027 = vmatprep.subr.mxu0 0.0
    %2028 = vmatpush1.msra.mxu0 %v1997
    %2029 = vmatprep.subr.mxu0 0.0
    %2030 = vmatpush1.msra.mxu0 %v1996
    %2031 = vmatprep.subr.mxu0 0.0
    %2032 = vmatpush1.msra.mxu0 %v1995
    %2033 = vmatprep.subr.mxu0 0.0
    %2034 = vmatpush1.msra.mxu0 %v1994
    %2035 = vmatprep.subr.mxu0 0.0
    %2036 = vmatpush1.msra.mxu0 %v1993
    %2037 = vmatprep.subr.mxu0 0.0
    %2038 = vmatpush1.msra.mxu0 %v1992
    %2039 = vmatprep.subr.mxu0 0.0
    %2040 = vmatpush1.msra.mxu0 %v1991
    %2041 = vmatprep.subr.mxu0 0.0
    %2042 = vmatpush2.msra.mxu0 0.0
    %2043 = vmatprep.subr.mxu0 0.0
    %2044 = vmatpush2.msra.mxu0 0.0
    %2045 = vmatprep.subr.mxu0 0.0
    %2046 = vmatpush2.msra.mxu0 0.0
    %2047 = vmatprep.subr.mxu0 0.0
    %2048 = vmatpush2.msra.mxu0 0.0
    %2049 = vmatprep.subr.mxu0 0.0
    %2050 = vmatpush2.msra.mxu0 0.0
    %2051 = vmatprep.subr.mxu0 0.0
    %2052 = vmatpush2.msra.mxu0 0.0
    %2053 = vmatprep.subr.mxu0 0.0
    %2054 = vmatpush2.msra.mxu0 0.0
    %2055 = vmatprep.subr.mxu0 0.0
    %2056 = vmatpush2.msra.mxu0 0.0
    %2057 = vmatprep.subr.mxu0 0.0
    %2058 = vmatpush2.msra.mxu0 0.0
    %2059 = vmatprep.subr.mxu0 0.0
    %2060 = vmatpush2.msra.mxu0 0.0
    %2061 = vmatprep.subr.mxu0 0.0
    %2062 = vmatpush2.msra.mxu0 0.0
    %2063 = vmatprep.subr.mxu0 0.0
    %2064 = vmatpush2.msra.mxu0 0.0
    %2065 = vmatprep.subr.mxu0 0.0
    %2066 = vmatpush2.msra.mxu0 0.0
    %2067 = vmatprep.subr.mxu0 0.0
    %2068 = vmatpush2.msra.mxu0 0.0
    %2069 = vmatprep.subr.mxu0 0.0
    %2070 = vmatpush2.msra.mxu0 0.0
    %2071 = vmatprep.subr.mxu0 0.0
    %2072 = vmatpush2.msra.mxu0 0.0
    %2073 = vmatprep.mubr.f32.mxu0 0.0
    %2074 = vmatmul.mubr.f32.gmra.mxu0 %v2004
    %v2075 = vpop.f32.mrf.mxu0
    %v2076 = vadd.f32 %v2002, %v2075
    %v2077 = vpop.f32.mrf.mxu0
    %2078 = vmatprep.mubr.f32.mxu0 0.0
    %2079 = vmatmul.mubr.f32.gmra.mxu0 %v2007
    %v2080 = vpop.f32.mrf.mxu0
    %v2081 = vadd.f32 %v2002, %v2080
    %v2082 = vpop.f32.mrf.mxu0
    %2083 = vdwg.mxu0
    %v2084 = vadd.f32 %v2076, %v1888
    %v2085 = vadd.f32 %v2081, %v1889
    %v2086 = vsel %vm73, %v2084, 0.0
    %2087 = vadd.xlane.f32.xlu0 %v2086
    %v2088 = vpop.xlane.xlu0 %2087
    %v2089 = vsel %vm73, %v2085, 0.0
    %2090 = vadd.xlane.f32.xlu0 %v2089
    %v2091 = vpop.xlane.xlu0 %2090
    %v2092 = vmul.f32 %v2088, %v842
    %v2093 = vmul.f32 %v2091, %v842
    %v2094 = vsub.f32 %v2084, %v2092
    %v2095 = vsub.f32 %v2085, %v2093
    %v2096 = vmul.f32 %v2094, %v2094
    %v2097 = vmul.f32 %v2095, %v2095
    %v2098 = vsel %vm73, %v2096, 0.0
    %2099 = vadd.xlane.f32.xlu0 %v2098
    %v2100 = vpop.xlane.xlu0 %2099
    %v2101 = vsel %vm73, %v2097, 0.0
    %2102 = vadd.xlane.f32.xlu0 %v2101
    %v2103 = vpop.xlane.xlu0 %2102
    %v2104 = vmul.f32 %v2100, %v842
    %v2105 = vmul.f32 %v2103, %v842
    %v2106 = vadd.f32 %v2104, 1e-12
    %v2107 = vadd.f32 %v2105, 1e-12
    %v2108 = vrsqrt.pop %v2106
    %v2109 = vrsqrt.pop %v2107
    %v2110 = vmul.f32 %v2094, %v2108
    %v2111 = vmul.f32 %v2095, %v2109
    %v2112 = vlaneseq
    %v2113 = vshrl.u32 %v2112, 7
    %v2114 = vsub.s32 6, %v2113
    %v2115 = vrot.slane %v1111, %v2114
    %v2116 = vmul.f32 %v2115, %v2110
    %v2117 = vmul.f32 %v2115, %v2111
    %v2118 = vlaneseq
    %v2119 = vshrl.u32 %v2118, 7
    %v2120 = vsub.s32 7, %v2119
    %v2121 = vrot.slane %v1111, %v2120
    %v2122 = vadd.f32 %v2116, %v2121
    %v2123 = vadd.f32 %v2117, %v2121
    %s2124 = scalar_lea.vmem [#allocation2], 16
    %2125 = vst.msk [vmem:[%s2124] sm:$0xff] %vm73, %v2122
    %2126 = vst.msk [vmem:[%s2124 + $0x8] sm:$0xff] %vm73, %v2123
    // Predicated region
    $region42: #{tpu_custom_call.1} parent=1 // pred_check
      _
    $region43: #{tpu_custom_call.1} parent=1 // pred_check_branch
      %2128 = sbr.rel (0) target = $region45
    $region44: #{tpu_custom_call.1} parent=1 // pred_region
      %s2130 = ssub.s32 512, 512
      %2131 = vsyncadd [#allocation3], %s2130
      %s2132 = sshll.u32 [#allocation2], 4
      %s2133 = int_to_ptr.vmem [resolvable:$true] %s2132
      %2138 = dma.vmem_to_hbm [thread:$0]  %s2133, 512, %s10, [#allocation3], 128, 128, 8
    $region45: #{tpu_custom_call.1} parent=1 // pred_fallthru
      _
    // Predicated region
    $region46: #{tpu_custom_call.1} parent=1 // pred_check
      _
    $region47: #{tpu_custom_call.1} parent=1 // pred_check_branch
      %2140 = sbr.rel (0) target = $region49
    $region48: #{tpu_custom_call.1} parent=1 // pred_region
      %2141 = dma.done [#allocation3], 512
    $region49: #{tpu_custom_call.1} parent=1 // pred_fallthru
      _
    %2142 = vsyncpa [#allocation3], 1

</llo_original>
